<compile_context>
chip_gen: v7x
topology: tpu7x:2x2x1
jax: 0.10.0
libtpu: 0.0.40
codegen_flags: <defaults>
</compile_context>

<pallas_src>
import functools

import jax
import jax.numpy as jnp
from jax.experimental import pallas as pl
from jax.experimental.pallas import tpu as pltpu


def _tpu_config():
    """Return (pre_v6, physical_vmem_bytes) for tile / dtype / VMEM budgeting."""
    kind = ""
    try:
        kind = jax.devices()[0].device_kind.lower()
    except Exception:
        pass
    pre_v6 = any(tag in kind for tag in ("v2", "v3", "v4", "v5"))
    try:
        phys = int(pltpu.get_tpu_info().vmem_capacity_bytes)
    except Exception:
        phys = 64 << 20  # conservative default (v7x per-TC VMEM)
    return pre_v6, phys


def nice_kernel(x_even_ref, x_odd_ref,
                w_in_ref, b_in_ref,
                w_mid_ref, b_mid_ref,
                w_out_ref, b_out_ref,
                es_even_ref, es_odd_ref,
                ll_ref,
                *, coupling, hidden, mask_config, use_bf16_act):
    bf16 = jnp.bfloat16
    even = x_even_ref[...]          # (D, TB) f32, batch on the lane axis
    odd = x_odd_ref[...]

    def bias_relu(h_f32, b_f32):
        # MXU accumulates in f32. On v6e/v7x keep the (mid, TB) activation in
        # bf16 for the bias-add + ReLU (packed-bf16 VALU -> half the VALU
        # traffic, and no separate f32->bf16 full-tile cast before the next
        # matmul). v5e has no bf16 VPU, so stay f32 there.
        if use_bf16_act:
            return jnp.maximum(h_f32.astype(bf16) + b_f32.astype(bf16), 0.0)
        return jnp.maximum(h_f32 + b_f32, 0.0)

    # ---- additive coupling layers, alternating mask ----
    for i in range(coupling):
        m = (mask_config + i) % 2
        if m == 1:
            on, off = even, odd
        else:
            off, on = even, odd

        h = bias_relu(
            jnp.dot(w_in_ref[i, :, :], off.astype(bf16),
                    preferred_element_type=jnp.float32),
            b_in_ref[i, :, :])
        for j in range(hidden - 1):
            h = bias_relu(
                jnp.dot(w_mid_ref[i, j, :, :], h.astype(bf16),
                        preferred_element_type=jnp.float32),
                b_mid_ref[i, j, :, :])
        shift = jnp.dot(w_out_ref[i, :, :], h.astype(bf16),
                        preferred_element_type=jnp.float32)
        shift = shift + b_out_ref[i, :, :]            # (D, TB) f32

        on = on + shift
        if m == 1:
            even, odd = on, off
        else:
            even, odd = off, on

    # ---- scaling layer (exp(scale) precomputed in the wrapper) ----
    z_even = even * es_even_ref[...]
    z_odd = odd * es_odd_ref[...]

    # ---- standard-logistic prior:
    #      -(softplus(z) + softplus(-z)) == -(|z| + 2*log1p(exp(-|z|)))
    a_e = jnp.abs(z_even)
    a_o = jnp.abs(z_odd)
    lp = (-(a_e + 2.0 * jnp.log1p(jnp.exp(-a_e)))
          - (a_o + 2.0 * jnp.log1p(jnp.exp(-a_o))))   # (D, TB) f32

    # per-sample reduction over features = sublane sum -> lane-dense (1, TB)
    # TODO(synk): if a bundle dump shows the XLU limiting, switch to a
    # ones-row (1, D) @ lp MXU matmul instead of the sublane reduce.
    ll_ref[...] = jnp.sum(lp, axis=0, keepdims=True)


def nice_forward(x, params, *, coupling, hidden, mask_config, batch_tile=None):
    """log_prob(x) for the NICE model; returns shape (B,) float32."""
    B, W = x.shape
    D = W // 2
    mid = params["w_in"].shape[1]

    pre_v6, phys_vmem = _tpu_config()
    use_bf16_act = not pre_v6

    if batch_tile is None:
        # 256 matches the 2x256x256 MXU on v6e/v7x, but only if it still gives
        # >= 2 grid steps so the "parallel" batch axis can shard across the two
        # v7x TensorCores; v5e's MXU is 128 wide so 128 is already matched.
        batch_tile = 256 if ((not pre_v6) and pl.cdiv(B, 256) >= 2) else 128
    TB = batch_tile
    B_pad = pl.cdiv(B, TB) * TB
    if B_pad != B:
        # NOTE: padded rows (zeros) produce finite but meaningless likelihoods;
        # they are sliced off below -- never reduce over the padded (1, B_pad) slab.
        x = jnp.pad(x, ((0, B_pad - B), (0, 0)))

    # wrapper-side layout plumbing: deinterleave mask halves, batch -> lanes
    x_even_t = x[:, 0::2].T.astype(jnp.float32)       # (D, B_pad)
    x_odd_t = x[:, 1::2].T.astype(jnp.float32)

    scale = params["scale"].astype(jnp.float32)
    es_even = jnp.exp(scale[0, 0::2])[:, None]        # (D, 1)
    es_odd = jnp.exp(scale[0, 1::2])[:, None]
    log_det_j = jnp.sum(scale)                        # batch-invariant scalar

    w_in, b_in = params["w_in"], params["b_in"]
    w_out, b_out = params["w_out"], params["b_out"]
    if hidden > 1:
        w_mid, b_mid = params["w_mid"], params["b_mid"]
    else:
        # hidden == 1: a zero-sized leading dim breaks BlockSpec lowering; pass
        # unused size-1 dummies (the kernel's range(hidden-1) loop never reads them).
        w_mid = jnp.zeros((coupling, 1, mid, mid), jnp.bfloat16)
        b_mid = jnp.zeros((coupling, 1, mid, 1), jnp.float32)
    H_mid = w_mid.shape[1]

    # VMEM budget: weights/biases single-buffered (pl.Buffered(1), constant index
    # maps) + double-buffered x / ll tiles + live-activation estimate + headroom,
    # capped at physical VMEM minus ~16 MiB for Mosaic internal scratch.
    def nbytes(a):
        return a.size * a.dtype.itemsize
    resident = (nbytes(w_in) + nbytes(w_mid) + nbytes(w_out)
                + nbytes(b_in) + nbytes(b_mid) + nbytes(b_out)
                + nbytes(es_even) + nbytes(es_odd))
    io_bytes = 2 * 4 * TB * (2 * D + 1)
    act_bytes = 6 * 4 * TB * max(mid, 2 * D)
    cap = max(phys_vmem - (16 << 20), 32 << 20)
    vmem_limit = int(min(max(resident + io_bytes + act_bytes + (8 << 20), 32 << 20),
                         cap))

    kernel = functools.partial(nice_kernel, coupling=coupling, hidden=hidden,
                               mask_config=mask_config, use_bf16_act=use_bf16_act)

    # Constant-index operands: single-buffer (the default double-buffering would
    # only waste VMEM since the same block is reused every grid step).
    const = pl.Buffered(1)

    grid = (B_pad // TB,)
    out = pl.pallas_call(
        kernel,
        out_shape=jax.ShapeDtypeStruct((1, B_pad), jnp.float32),
        grid_spec=pltpu.PrefetchScalarGridSpec(
            num_scalar_prefetch=0,
            grid=grid,
            in_specs=[
                pl.BlockSpec((D, TB), lambda b: (0, b)),                      # x_even^T
                pl.BlockSpec((D, TB), lambda b: (0, b)),                      # x_odd^T
                pl.BlockSpec((coupling, mid, D), lambda b: (0, 0, 0),
                             pipeline_mode=const),                            # w_in
                pl.BlockSpec((coupling, mid, 1), lambda b: (0, 0, 0),
                             pipeline_mode=const),                            # b_in
                pl.BlockSpec((coupling, H_mid, mid, mid),
                             lambda b: (0, 0, 0, 0), pipeline_mode=const),    # w_mid
                pl.BlockSpec((coupling, H_mid, mid, 1),
                             lambda b: (0, 0, 0, 0), pipeline_mode=const),    # b_mid
                pl.BlockSpec((coupling, D, mid), lambda b: (0, 0, 0),
                             pipeline_mode=const),                            # w_out
                pl.BlockSpec((coupling, D, 1), lambda b: (0, 0, 0),
                             pipeline_mode=const),                            # b_out
                pl.BlockSpec((D, 1), lambda b: (0, 0), pipeline_mode=const),  # exp(s) even
                pl.BlockSpec((D, 1), lambda b: (0, 0), pipeline_mode=const),  # exp(s) odd
            ],
            out_specs=pl.BlockSpec((1, TB), lambda b: (0, b)),
        ),
        compiler_params=pltpu.CompilerParams(
            dimension_semantics=("parallel",),
            vmem_limit_bytes=vmem_limit),
    )(x_even_t, x_odd_t, w_in, b_in, w_mid, b_mid, w_out, b_out, es_even, es_odd)

    return out[0, :B] + log_det_j


def init_params(key, in_out_dim, mid_dim, hidden, coupling):
    """Weights in PyTorch (out_features, in_features) layout; bf16 for the MXU."""
    D = in_out_dim // 2
    bf16 = jnp.bfloat16
    ks = jax.random.split(key, 7)
    return {
        "w_in":  (0.1 * jax.random.normal(ks[0], (coupling, mid_dim, D),
                                          jnp.float32)).astype(bf16),
        "b_in":  0.1 * jax.random.normal(ks[1], (coupling, mid_dim, 1), jnp.float32),
        "w_mid": (0.1 * jax.random.normal(ks[2], (coupling, hidden - 1, mid_dim, mid_dim),
                                          jnp.float32)).astype(bf16),
        "b_mid": 0.1 * jax.random.normal(ks[3], (coupling, hidden - 1, mid_dim, 1),
                                         jnp.float32),
        "w_out": (0.1 * jax.random.normal(ks[4], (coupling, D, mid_dim),
                                          jnp.float32)).astype(bf16),
        "b_out": 0.1 * jax.random.normal(ks[5], (coupling, D, 1), jnp.float32),
        # torch init is zeros; use small random values so the scaling path is exercised
        "scale": 0.01 * jax.random.normal(ks[6], (1, in_out_dim), jnp.float32),
    }


def nice_reference(x, p, *, coupling, hidden, mask_config, use_bf16_act):
    """Pure-JAX mirror of the PyTorch forward (same dtype choices as the kernel)."""
    bf16 = jnp.bfloat16
    B, W = x.shape
    x = x.astype(jnp.float32)

    def bias_relu(h_f32, b_f32):
        if use_bf16_act:
            return jnp.maximum(h_f32.astype(bf16) + b_f32.astype(bf16), 0.0)
        return jnp.maximum(h_f32 + b_f32, 0.0)

    for i in range(coupling):
        m = (mask_config + i) % 2
        xr = x.reshape(B, W // 2, 2)
        if m == 1:
            on, off = xr[:, :, 0], xr[:, :, 1]
        else:
            off, on = xr[:, :, 0], xr[:, :, 1]
        h = bias_relu(jnp.dot(off.astype(bf16), p["w_in"][i].T,
                              preferred_element_type=jnp.float32),
                      p["b_in"][i, :, 0])
        for j in range(hidden - 1):
            h = bias_relu(jnp.dot(h.astype(bf16), p["w_mid"][i, j].T,
                                  preferred_element_type=jnp.float32),
                          p["b_mid"][i, j, :, 0])
        shift = jnp.dot(h.astype(bf16), p["w_out"][i].T,
                        preferred_element_type=jnp.float32) + p["b_out"][i, :, 0]
        on = on + shift
        if m == 1:
            xr = jnp.stack((on, off), axis=2)
        else:
            xr = jnp.stack((off, on), axis=2)
        x = xr.reshape(B, W)
    scale = p["scale"].astype(jnp.float32)
    log_det = jnp.sum(scale)
    z = x * jnp.exp(scale)
    lp = -(jax.nn.softplus(z) + jax.nn.softplus(-z))
    return jnp.sum(lp, axis=1) + log_det


if __name__ == "__main__":
    pre_v6, _ = _tpu_config()
    use_bf16_act = not pre_v6

    # Main config: B=200 exercises the padded tail and a 2-step parallel grid.
    B, IN_OUT_DIM, MID_DIM, HIDDEN, COUPLING, MASK_CONFIG = 200, 16, 32, 4, 4, 1
    ks = jax.random.split(jax.random.PRNGKey(0), 4)
    x = jax.random.normal(ks[0], (B, IN_OUT_DIM), jnp.float32)
    params = init_params(ks[1], IN_OUT_DIM, MID_DIM, HIDDEN, COUPLING)

    ll = nice_forward(x, params, coupling=COUPLING, hidden=HIDDEN,
                      mask_config=MASK_CONFIG)
    ll = jax.block_until_ready(ll)
    ll_ref = nice_reference(x, params, coupling=COUPLING, hidden=HIDDEN,
                            mask_config=MASK_CONFIG, use_bf16_act=use_bf16_act)
    assert ll.shape == (B,)
    assert jnp.allclose(ll, ll_ref, atol=5e-3, rtol=2e-3), (ll, ll_ref)

    # hidden == 1 (no mid_block): exercises the dummy-w_mid lowering guard.
    B2, DIM2, MID2, HID2, CPL2, MASK2 = 64, 8, 16, 1, 2, 0
    x2 = jax.random.normal(ks[2], (B2, DIM2), jnp.float32)
    p2 = init_params(ks[3], DIM2, MID2, HID2, CPL2)
    ll2 = jax.block_until_ready(
        nice_forward(x2, p2, coupling=CPL2, hidden=HID2, mask_config=MASK2))
    ll2_ref = nice_reference(x2, p2, coupling=CPL2, hidden=HID2,
                             mask_config=MASK2, use_bf16_act=use_bf16_act)
    assert ll2.shape == (B2,)
    assert jnp.allclose(ll2, ll2_ref, atol=5e-3, rtol=2e-3), (ll2, ll2_ref)

    print("KERNEL_OK")
</pallas_src>

<mosaic_0001>
module attributes {stable_mosaic.version = 11 : i64} {
  func.func @nice_kernel(%arg0: i32, %arg1: memref<8x128xf32, #tpu.memory_space<vmem>>, %arg2: memref<8x128xf32, #tpu.memory_space<vmem>>, %arg3: memref<4x32x8xbf16, #tpu.memory_space<vmem>>, %arg4: memref<4x32x1xf32, #tpu.memory_space<vmem>>, %arg5: memref<4x3x32x32xbf16, #tpu.memory_space<vmem>>, %arg6: memref<4x3x32x1xf32, #tpu.memory_space<vmem>>, %arg7: memref<4x8x32xbf16, #tpu.memory_space<vmem>>, %arg8: memref<4x8x1xf32, #tpu.memory_space<vmem>>, %arg9: memref<8x1xf32, #tpu.memory_space<vmem>>, %arg10: memref<8x1xf32, #tpu.memory_space<vmem>>, %arg11: memref<1x128xf32, #tpu.memory_space<vmem>>) attributes {dimension_semantics = [#tpu.dimension_semantics<parallel>], iteration_bounds = array<i64: 2>, scalar_prefetch = 0 : i64, scratch_operands = 0 : i64, tpu.core_type = #tpu.core_type<tc>, window_params = [{transform_indices = @transform_0, window_bounds = array<i64: 8, 128>}, {transform_indices = @transform_1, window_bounds = array<i64: 8, 128>}, {pipeline_mode = #tpu.pipeline_mode<synchronous>, transform_indices = @transform_2, window_bounds = array<i64: 4, 32, 8>}, {pipeline_mode = #tpu.pipeline_mode<synchronous>, transform_indices = @transform_3, window_bounds = array<i64: 4, 32, 1>}, {pipeline_mode = #tpu.pipeline_mode<synchronous>, transform_indices = @transform_4, window_bounds = array<i64: 4, 3, 32, 32>}, {pipeline_mode = #tpu.pipeline_mode<synchronous>, transform_indices = @transform_5, window_bounds = array<i64: 4, 3, 32, 1>}, {pipeline_mode = #tpu.pipeline_mode<synchronous>, transform_indices = @transform_6, window_bounds = array<i64: 4, 8, 32>}, {pipeline_mode = #tpu.pipeline_mode<synchronous>, transform_indices = @transform_7, window_bounds = array<i64: 4, 8, 1>}, {pipeline_mode = #tpu.pipeline_mode<synchronous>, transform_indices = @transform_8, window_bounds = array<i64: 8, 1>}, {pipeline_mode = #tpu.pipeline_mode<synchronous>, transform_indices = @transform_9, window_bounds = array<i64: 8, 1>}, {transform_indices = @transform_10, window_bounds = array<i64: 1, 128>}]} {
    %c0 = arith.constant 0 : index
    %c0_0 = arith.constant 0 : index
    %0 = vector.load %arg1[%c0, %c0_0] : memref<8x128xf32, #tpu.memory_space<vmem>>, vector<8x128xf32>
    %c0_1 = arith.constant 0 : index
    %c0_2 = arith.constant 0 : index
    %1 = vector.load %arg2[%c0_1, %c0_2] : memref<8x128xf32, #tpu.memory_space<vmem>>, vector<8x128xf32>
    %c0_3 = arith.constant 0 : index
    %c0_4 = arith.constant 0 : index
    %c0_5 = arith.constant 0 : index
    %2 = vector.load %arg3[%c0_3, %c0_4, %c0_5] : memref<4x32x8xbf16, #tpu.memory_space<vmem>>, vector<1x32x8xbf16>
    %3 = vector.shape_cast %2 : vector<1x32x8xbf16> to vector<32x8xbf16>
    %4 = arith.truncf %1 : vector<8x128xf32> to vector<8x128xbf16>
    %cst = arith.constant dense<0.000000e+00> : vector<32x128xf32>
    %5 = tpu.matmul %3, %4, %cst {dimension_numbers = #tpu.dot_dimension_numbers<[1], [0], [0], [1], [0, 0, 1, 1], [], []>} : vector<32x8xbf16>, vector<8x128xbf16>, vector<32x128xf32> -> vector<32x128xf32>
    %c0_6 = arith.constant 0 : index
    %c0_7 = arith.constant 0 : index
    %c0_8 = arith.constant 0 : index
    %6 = vector.load %arg4[%c0_6, %c0_7, %c0_8] : memref<4x32x1xf32, #tpu.memory_space<vmem>>, vector<1x32x1xf32>
    %7 = vector.shape_cast %6 : vector<1x32x1xf32> to vector<32x1xf32>
    %8 = arith.truncf %5 : vector<32x128xf32> to vector<32x128xbf16>
    %9 = arith.truncf %7 : vector<32x1xf32> to vector<32x1xbf16>
    %10 = vector.broadcast %9 : vector<32x1xbf16> to vector<32x128xbf16>
    %11 = arith.addf %8, %10 : vector<32x128xbf16>
    %cst_9 = arith.constant 0.000000e+00 : bf16
    %12 = vector.broadcast %cst_9 : bf16 to vector<32x128xbf16>
    %13 = arith.maximumf %11, %12 : vector<32x128xbf16>
    %c0_10 = arith.constant 0 : index
    %c0_11 = arith.constant 0 : index
    %c0_12 = arith.constant 0 : index
    %c0_13 = arith.constant 0 : index
    %14 = vector.load %arg5[%c0_10, %c0_11, %c0_12, %c0_13] : memref<4x3x32x32xbf16, #tpu.memory_space<vmem>>, vector<1x1x32x32xbf16>
    %15 = vector.shape_cast %14 : vector<1x1x32x32xbf16> to vector<32x32xbf16>
    %cst_14 = arith.constant dense<0.000000e+00> : vector<32x128xf32>
    %16 = tpu.matmul %15, %13, %cst_14 {dimension_numbers = #tpu.dot_dimension_numbers<[1], [0], [0], [1], [0, 0, 1, 1], [], []>} : vector<32x32xbf16>, vector<32x128xbf16>, vector<32x128xf32> -> vector<32x128xf32>
    %c0_15 = arith.constant 0 : index
    %c0_16 = arith.constant 0 : index
    %c0_17 = arith.constant 0 : index
    %c0_18 = arith.constant 0 : index
    %17 = vector.load %arg6[%c0_15, %c0_16, %c0_17, %c0_18] : memref<4x3x32x1xf32, #tpu.memory_space<vmem>>, vector<1x1x32x1xf32>
    %18 = vector.shape_cast %17 : vector<1x1x32x1xf32> to vector<32x1xf32>
    %19 = arith.truncf %16 : vector<32x128xf32> to vector<32x128xbf16>
    %20 = arith.truncf %18 : vector<32x1xf32> to vector<32x1xbf16>
    %21 = vector.broadcast %20 : vector<32x1xbf16> to vector<32x128xbf16>
    %22 = arith.addf %19, %21 : vector<32x128xbf16>
    %cst_19 = arith.constant 0.000000e+00 : bf16
    %23 = vector.broadcast %cst_19 : bf16 to vector<32x128xbf16>
    %24 = arith.maximumf %22, %23 : vector<32x128xbf16>
    %c0_20 = arith.constant 0 : index
    %c1 = arith.constant 1 : index
    %c0_21 = arith.constant 0 : index
    %c0_22 = arith.constant 0 : index
    %25 = vector.load %arg5[%c0_20, %c1, %c0_21, %c0_22] : memref<4x3x32x32xbf16, #tpu.memory_space<vmem>>, vector<1x1x32x32xbf16>
    %26 = vector.shape_cast %25 : vector<1x1x32x32xbf16> to vector<32x32xbf16>
    %cst_23 = arith.constant dense<0.000000e+00> : vector<32x128xf32>
    %27 = tpu.matmul %26, %24, %cst_23 {dimension_numbers = #tpu.dot_dimension_numbers<[1], [0], [0], [1], [0, 0, 1, 1], [], []>} : vector<32x32xbf16>, vector<32x128xbf16>, vector<32x128xf32> -> vector<32x128xf32>
    %c0_24 = arith.constant 0 : index
    %c1_25 = arith.constant 1 : index
    %c0_26 = arith.constant 0 : index
    %c0_27 = arith.constant 0 : index
    %28 = vector.load %arg6[%c0_24, %c1_25, %c0_26, %c0_27] : memref<4x3x32x1xf32, #tpu.memory_space<vmem>>, vector<1x1x32x1xf32>
    %29 = vector.shape_cast %28 : vector<1x1x32x1xf32> to vector<32x1xf32>
    %30 = arith.truncf %27 : vector<32x128xf32> to vector<32x128xbf16>
    %31 = arith.truncf %29 : vector<32x1xf32> to vector<32x1xbf16>
    %32 = vector.broadcast %31 : vector<32x1xbf16> to vector<32x128xbf16>
    %33 = arith.addf %30, %32 : vector<32x128xbf16>
    %cst_28 = arith.constant 0.000000e+00 : bf16
    %34 = vector.broadcast %cst_28 : bf16 to vector<32x128xbf16>
    %35 = arith.maximumf %33, %34 : vector<32x128xbf16>
    %c0_29 = arith.constant 0 : index
    %c2 = arith.constant 2 : index
    %c0_30 = arith.constant 0 : index
    %c0_31 = arith.constant 0 : index
    %36 = vector.load %arg5[%c0_29, %c2, %c0_30, %c0_31] : memref<4x3x32x32xbf16, #tpu.memory_space<vmem>>, vector<1x1x32x32xbf16>
    %37 = vector.shape_cast %36 : vector<1x1x32x32xbf16> to vector<32x32xbf16>
    %cst_32 = arith.constant dense<0.000000e+00> : vector<32x128xf32>
    %38 = tpu.matmul %37, %35, %cst_32 {dimension_numbers = #tpu.dot_dimension_numbers<[1], [0], [0], [1], [0, 0, 1, 1], [], []>} : vector<32x32xbf16>, vector<32x128xbf16>, vector<32x128xf32> -> vector<32x128xf32>
    %c0_33 = arith.constant 0 : index
    %c2_34 = arith.constant 2 : index
    %c0_35 = arith.constant 0 : index
    %c0_36 = arith.constant 0 : index
    %39 = vector.load %arg6[%c0_33, %c2_34, %c0_35, %c0_36] : memref<4x3x32x1xf32, #tpu.memory_space<vmem>>, vector<1x1x32x1xf32>
    %40 = vector.shape_cast %39 : vector<1x1x32x1xf32> to vector<32x1xf32>
    %41 = arith.truncf %38 : vector<32x128xf32> to vector<32x128xbf16>
    %42 = arith.truncf %40 : vector<32x1xf32> to vector<32x1xbf16>
    %43 = vector.broadcast %42 : vector<32x1xbf16> to vector<32x128xbf16>
    %44 = arith.addf %41, %43 : vector<32x128xbf16>
    %cst_37 = arith.constant 0.000000e+00 : bf16
    %45 = vector.broadcast %cst_37 : bf16 to vector<32x128xbf16>
    %46 = arith.maximumf %44, %45 : vector<32x128xbf16>
    %c0_38 = arith.constant 0 : index
    %c0_39 = arith.constant 0 : index
    %c0_40 = arith.constant 0 : index
    %47 = vector.load %arg7[%c0_38, %c0_39, %c0_40] : memref<4x8x32xbf16, #tpu.memory_space<vmem>>, vector<1x8x32xbf16>
    %48 = vector.shape_cast %47 : vector<1x8x32xbf16> to vector<8x32xbf16>
    %cst_41 = arith.constant dense<0.000000e+00> : vector<8x128xf32>
    %49 = tpu.matmul %48, %46, %cst_41 {dimension_numbers = #tpu.dot_dimension_numbers<[1], [0], [0], [1], [0, 0, 1, 1], [], []>} : vector<8x32xbf16>, vector<32x128xbf16>, vector<8x128xf32> -> vector<8x128xf32>
    %c0_42 = arith.constant 0 : index
    %c0_43 = arith.constant 0 : index
    %c0_44 = arith.constant 0 : index
    %50 = vector.load %arg8[%c0_42, %c0_43, %c0_44] : memref<4x8x1xf32, #tpu.memory_space<vmem>>, vector<1x8x1xf32>
    %51 = vector.shape_cast %50 : vector<1x8x1xf32> to vector<8x1xf32>
    %52 = vector.broadcast %51 : vector<8x1xf32> to vector<8x128xf32>
    %53 = arith.addf %49, %52 : vector<8x128xf32>
    %54 = arith.addf %0, %53 : vector<8x128xf32>
    %c1_45 = arith.constant 1 : index
    %c0_46 = arith.constant 0 : index
    %c0_47 = arith.constant 0 : index
    %55 = vector.load %arg3[%c1_45, %c0_46, %c0_47] : memref<4x32x8xbf16, #tpu.memory_space<vmem>>, vector<1x32x8xbf16>
    %56 = vector.shape_cast %55 : vector<1x32x8xbf16> to vector<32x8xbf16>
    %57 = arith.truncf %54 : vector<8x128xf32> to vector<8x128xbf16>
    %cst_48 = arith.constant dense<0.000000e+00> : vector<32x128xf32>
    %58 = tpu.matmul %56, %57, %cst_48 {dimension_numbers = #tpu.dot_dimension_numbers<[1], [0], [0], [1], [0, 0, 1, 1], [], []>} : vector<32x8xbf16>, vector<8x128xbf16>, vector<32x128xf32> -> vector<32x128xf32>
    %c1_49 = arith.constant 1 : index
    %c0_50 = arith.constant 0 : index
    %c0_51 = arith.constant 0 : index
    %59 = vector.load %arg4[%c1_49, %c0_50, %c0_51] : memref<4x32x1xf32, #tpu.memory_space<vmem>>, vector<1x32x1xf32>
    %60 = vector.shape_cast %59 : vector<1x32x1xf32> to vector<32x1xf32>
    %61 = arith.truncf %58 : vector<32x128xf32> to vector<32x128xbf16>
    %62 = arith.truncf %60 : vector<32x1xf32> to vector<32x1xbf16>
    %63 = vector.broadcast %62 : vector<32x1xbf16> to vector<32x128xbf16>
    %64 = arith.addf %61, %63 : vector<32x128xbf16>
    %cst_52 = arith.constant 0.000000e+00 : bf16
    %65 = vector.broadcast %cst_52 : bf16 to vector<32x128xbf16>
    %66 = arith.maximumf %64, %65 : vector<32x128xbf16>
    %c1_53 = arith.constant 1 : index
    %c0_54 = arith.constant 0 : index
    %c0_55 = arith.constant 0 : index
    %c0_56 = arith.constant 0 : index
    %67 = vector.load %arg5[%c1_53, %c0_54, %c0_55, %c0_56] : memref<4x3x32x32xbf16, #tpu.memory_space<vmem>>, vector<1x1x32x32xbf16>
    %68 = vector.shape_cast %67 : vector<1x1x32x32xbf16> to vector<32x32xbf16>
    %cst_57 = arith.constant dense<0.000000e+00> : vector<32x128xf32>
    %69 = tpu.matmul %68, %66, %cst_57 {dimension_numbers = #tpu.dot_dimension_numbers<[1], [0], [0], [1], [0, 0, 1, 1], [], []>} : vector<32x32xbf16>, vector<32x128xbf16>, vector<32x128xf32> -> vector<32x128xf32>
    %c1_58 = arith.constant 1 : index
    %c0_59 = arith.constant 0 : index
    %c0_60 = arith.constant 0 : index
    %c0_61 = arith.constant 0 : index
    %70 = vector.load %arg6[%c1_58, %c0_59, %c0_60, %c0_61] : memref<4x3x32x1xf32, #tpu.memory_space<vmem>>, vector<1x1x32x1xf32>
    %71 = vector.shape_cast %70 : vector<1x1x32x1xf32> to vector<32x1xf32>
    %72 = arith.truncf %69 : vector<32x128xf32> to vector<32x128xbf16>
    %73 = arith.truncf %71 : vector<32x1xf32> to vector<32x1xbf16>
    %74 = vector.broadcast %73 : vector<32x1xbf16> to vector<32x128xbf16>
    %75 = arith.addf %72, %74 : vector<32x128xbf16>
    %cst_62 = arith.constant 0.000000e+00 : bf16
    %76 = vector.broadcast %cst_62 : bf16 to vector<32x128xbf16>
    %77 = arith.maximumf %75, %76 : vector<32x128xbf16>
    %c1_63 = arith.constant 1 : index
    %c1_64 = arith.constant 1 : index
    %c0_65 = arith.constant 0 : index
    %c0_66 = arith.constant 0 : index
    %78 = vector.load %arg5[%c1_63, %c1_64, %c0_65, %c0_66] : memref<4x3x32x32xbf16, #tpu.memory_space<vmem>>, vector<1x1x32x32xbf16>
    %79 = vector.shape_cast %78 : vector<1x1x32x32xbf16> to vector<32x32xbf16>
    %cst_67 = arith.constant dense<0.000000e+00> : vector<32x128xf32>
    %80 = tpu.matmul %79, %77, %cst_67 {dimension_numbers = #tpu.dot_dimension_numbers<[1], [0], [0], [1], [0, 0, 1, 1], [], []>} : vector<32x32xbf16>, vector<32x128xbf16>, vector<32x128xf32> -> vector<32x128xf32>
    %c1_68 = arith.constant 1 : index
    %c1_69 = arith.constant 1 : index
    %c0_70 = arith.constant 0 : index
    %c0_71 = arith.constant 0 : index
    %81 = vector.load %arg6[%c1_68, %c1_69, %c0_70, %c0_71] : memref<4x3x32x1xf32, #tpu.memory_space<vmem>>, vector<1x1x32x1xf32>
    %82 = vector.shape_cast %81 : vector<1x1x32x1xf32> to vector<32x1xf32>
    %83 = arith.truncf %80 : vector<32x128xf32> to vector<32x128xbf16>
    %84 = arith.truncf %82 : vector<32x1xf32> to vector<32x1xbf16>
    %85 = vector.broadcast %84 : vector<32x1xbf16> to vector<32x128xbf16>
    %86 = arith.addf %83, %85 : vector<32x128xbf16>
    %cst_72 = arith.constant 0.000000e+00 : bf16
    %87 = vector.broadcast %cst_72 : bf16 to vector<32x128xbf16>
    %88 = arith.maximumf %86, %87 : vector<32x128xbf16>
    %c1_73 = arith.constant 1 : index
    %c2_74 = arith.constant 2 : index
    %c0_75 = arith.constant 0 : index
    %c0_76 = arith.constant 0 : index
    %89 = vector.load %arg5[%c1_73, %c2_74, %c0_75, %c0_76] : memref<4x3x32x32xbf16, #tpu.memory_space<vmem>>, vector<1x1x32x32xbf16>
    %90 = vector.shape_cast %89 : vector<1x1x32x32xbf16> to vector<32x32xbf16>
    %cst_77 = arith.constant dense<0.000000e+00> : vector<32x128xf32>
    %91 = tpu.matmul %90, %88, %cst_77 {dimension_numbers = #tpu.dot_dimension_numbers<[1], [0], [0], [1], [0, 0, 1, 1], [], []>} : vector<32x32xbf16>, vector<32x128xbf16>, vector<32x128xf32> -> vector<32x128xf32>
    %c1_78 = arith.constant 1 : index
    %c2_79 = arith.constant 2 : index
    %c0_80 = arith.constant 0 : index
    %c0_81 = arith.constant 0 : index
    %92 = vector.load %arg6[%c1_78, %c2_79, %c0_80, %c0_81] : memref<4x3x32x1xf32, #tpu.memory_space<vmem>>, vector<1x1x32x1xf32>
    %93 = vector.shape_cast %92 : vector<1x1x32x1xf32> to vector<32x1xf32>
    %94 = arith.truncf %91 : vector<32x128xf32> to vector<32x128xbf16>
    %95 = arith.truncf %93 : vector<32x1xf32> to vector<32x1xbf16>
    %96 = vector.broadcast %95 : vector<32x1xbf16> to vector<32x128xbf16>
    %97 = arith.addf %94, %96 : vector<32x128xbf16>
    %cst_82 = arith.constant 0.000000e+00 : bf16
    %98 = vector.broadcast %cst_82 : bf16 to vector<32x128xbf16>
    %99 = arith.maximumf %97, %98 : vector<32x128xbf16>
    %c1_83 = arith.constant 1 : index
    %c0_84 = arith.constant 0 : index
    %c0_85 = arith.constant 0 : index
    %100 = vector.load %arg7[%c1_83, %c0_84, %c0_85] : memref<4x8x32xbf16, #tpu.memory_space<vmem>>, vector<1x8x32xbf16>
    %101 = vector.shape_cast %100 : vector<1x8x32xbf16> to vector<8x32xbf16>
    %cst_86 = arith.constant dense<0.000000e+00> : vector<8x128xf32>
    %102 = tpu.matmul %101, %99, %cst_86 {dimension_numbers = #tpu.dot_dimension_numbers<[1], [0], [0], [1], [0, 0, 1, 1], [], []>} : vector<8x32xbf16>, vector<32x128xbf16>, vector<8x128xf32> -> vector<8x128xf32>
    %c1_87 = arith.constant 1 : index
    %c0_88 = arith.constant 0 : index
    %c0_89 = arith.constant 0 : index
    %103 = vector.load %arg8[%c1_87, %c0_88, %c0_89] : memref<4x8x1xf32, #tpu.memory_space<vmem>>, vector<1x8x1xf32>
    %104 = vector.shape_cast %103 : vector<1x8x1xf32> to vector<8x1xf32>
    %105 = vector.broadcast %104 : vector<8x1xf32> to vector<8x128xf32>
    %106 = arith.addf %102, %105 : vector<8x128xf32>
    %107 = arith.addf %1, %106 : vector<8x128xf32>
    %c2_90 = arith.constant 2 : index
    %c0_91 = arith.constant 0 : index
    %c0_92 = arith.constant 0 : index
    %108 = vector.load %arg3[%c2_90, %c0_91, %c0_92] : memref<4x32x8xbf16, #tpu.memory_space<vmem>>, vector<1x32x8xbf16>
    %109 = vector.shape_cast %108 : vector<1x32x8xbf16> to vector<32x8xbf16>
    %110 = arith.truncf %107 : vector<8x128xf32> to vector<8x128xbf16>
    %cst_93 = arith.constant dense<0.000000e+00> : vector<32x128xf32>
    %111 = tpu.matmul %109, %110, %cst_93 {dimension_numbers = #tpu.dot_dimension_numbers<[1], [0], [0], [1], [0, 0, 1, 1], [], []>} : vector<32x8xbf16>, vector<8x128xbf16>, vector<32x128xf32> -> vector<32x128xf32>
    %c2_94 = arith.constant 2 : index
    %c0_95 = arith.constant 0 : index
    %c0_96 = arith.constant 0 : index
    %112 = vector.load %arg4[%c2_94, %c0_95, %c0_96] : memref<4x32x1xf32, #tpu.memory_space<vmem>>, vector<1x32x1xf32>
    %113 = vector.shape_cast %112 : vector<1x32x1xf32> to vector<32x1xf32>
    %114 = arith.truncf %111 : vector<32x128xf32> to vector<32x128xbf16>
    %115 = arith.truncf %113 : vector<32x1xf32> to vector<32x1xbf16>
    %116 = vector.broadcast %115 : vector<32x1xbf16> to vector<32x128xbf16>
    %117 = arith.addf %114, %116 : vector<32x128xbf16>
    %cst_97 = arith.constant 0.000000e+00 : bf16
    %118 = vector.broadcast %cst_97 : bf16 to vector<32x128xbf16>
    %119 = arith.maximumf %117, %118 : vector<32x128xbf16>
    %c2_98 = arith.constant 2 : index
    %c0_99 = arith.constant 0 : index
    %c0_100 = arith.constant 0 : index
    %c0_101 = arith.constant 0 : index
    %120 = vector.load %arg5[%c2_98, %c0_99, %c0_100, %c0_101] : memref<4x3x32x32xbf16, #tpu.memory_space<vmem>>, vector<1x1x32x32xbf16>
    %121 = vector.shape_cast %120 : vector<1x1x32x32xbf16> to vector<32x32xbf16>
    %cst_102 = arith.constant dense<0.000000e+00> : vector<32x128xf32>
    %122 = tpu.matmul %121, %119, %cst_102 {dimension_numbers = #tpu.dot_dimension_numbers<[1], [0], [0], [1], [0, 0, 1, 1], [], []>} : vector<32x32xbf16>, vector<32x128xbf16>, vector<32x128xf32> -> vector<32x128xf32>
    %c2_103 = arith.constant 2 : index
    %c0_104 = arith.constant 0 : index
    %c0_105 = arith.constant 0 : index
    %c0_106 = arith.constant 0 : index
    %123 = vector.load %arg6[%c2_103, %c0_104, %c0_105, %c0_106] : memref<4x3x32x1xf32, #tpu.memory_space<vmem>>, vector<1x1x32x1xf32>
    %124 = vector.shape_cast %123 : vector<1x1x32x1xf32> to vector<32x1xf32>
    %125 = arith.truncf %122 : vector<32x128xf32> to vector<32x128xbf16>
    %126 = arith.truncf %124 : vector<32x1xf32> to vector<32x1xbf16>
    %127 = vector.broadcast %126 : vector<32x1xbf16> to vector<32x128xbf16>
    %128 = arith.addf %125, %127 : vector<32x128xbf16>
    %cst_107 = arith.constant 0.000000e+00 : bf16
    %129 = vector.broadcast %cst_107 : bf16 to vector<32x128xbf16>
    %130 = arith.maximumf %128, %129 : vector<32x128xbf16>
    %c2_108 = arith.constant 2 : index
    %c1_109 = arith.constant 1 : index
    %c0_110 = arith.constant 0 : index
    %c0_111 = arith.constant 0 : index
    %131 = vector.load %arg5[%c2_108, %c1_109, %c0_110, %c0_111] : memref<4x3x32x32xbf16, #tpu.memory_space<vmem>>, vector<1x1x32x32xbf16>
    %132 = vector.shape_cast %131 : vector<1x1x32x32xbf16> to vector<32x32xbf16>
    %cst_112 = arith.constant dense<0.000000e+00> : vector<32x128xf32>
    %133 = tpu.matmul %132, %130, %cst_112 {dimension_numbers = #tpu.dot_dimension_numbers<[1], [0], [0], [1], [0, 0, 1, 1], [], []>} : vector<32x32xbf16>, vector<32x128xbf16>, vector<32x128xf32> -> vector<32x128xf32>
    %c2_113 = arith.constant 2 : index
    %c1_114 = arith.constant 1 : index
    %c0_115 = arith.constant 0 : index
    %c0_116 = arith.constant 0 : index
    %134 = vector.load %arg6[%c2_113, %c1_114, %c0_115, %c0_116] : memref<4x3x32x1xf32, #tpu.memory_space<vmem>>, vector<1x1x32x1xf32>
    %135 = vector.shape_cast %134 : vector<1x1x32x1xf32> to vector<32x1xf32>
    %136 = arith.truncf %133 : vector<32x128xf32> to vector<32x128xbf16>
    %137 = arith.truncf %135 : vector<32x1xf32> to vector<32x1xbf16>
    %138 = vector.broadcast %137 : vector<32x1xbf16> to vector<32x128xbf16>
    %139 = arith.addf %136, %138 : vector<32x128xbf16>
    %cst_117 = arith.constant 0.000000e+00 : bf16
    %140 = vector.broadcast %cst_117 : bf16 to vector<32x128xbf16>
    %141 = arith.maximumf %139, %140 : vector<32x128xbf16>
    %c2_118 = arith.constant 2 : index
    %c2_119 = arith.constant 2 : index
    %c0_120 = arith.constant 0 : index
    %c0_121 = arith.constant 0 : index
    %142 = vector.load %arg5[%c2_118, %c2_119, %c0_120, %c0_121] : memref<4x3x32x32xbf16, #tpu.memory_space<vmem>>, vector<1x1x32x32xbf16>
    %143 = vector.shape_cast %142 : vector<1x1x32x32xbf16> to vector<32x32xbf16>
    %cst_122 = arith.constant dense<0.000000e+00> : vector<32x128xf32>
    %144 = tpu.matmul %143, %141, %cst_122 {dimension_numbers = #tpu.dot_dimension_numbers<[1], [0], [0], [1], [0, 0, 1, 1], [], []>} : vector<32x32xbf16>, vector<32x128xbf16>, vector<32x128xf32> -> vector<32x128xf32>
    %c2_123 = arith.constant 2 : index
    %c2_124 = arith.constant 2 : index
    %c0_125 = arith.constant 0 : index
    %c0_126 = arith.constant 0 : index
    %145 = vector.load %arg6[%c2_123, %c2_124, %c0_125, %c0_126] : memref<4x3x32x1xf32, #tpu.memory_space<vmem>>, vector<1x1x32x1xf32>
    %146 = vector.shape_cast %145 : vector<1x1x32x1xf32> to vector<32x1xf32>
    %147 = arith.truncf %144 : vector<32x128xf32> to vector<32x128xbf16>
    %148 = arith.truncf %146 : vector<32x1xf32> to vector<32x1xbf16>
    %149 = vector.broadcast %148 : vector<32x1xbf16> to vector<32x128xbf16>
    %150 = arith.addf %147, %149 : vector<32x128xbf16>
    %cst_127 = arith.constant 0.000000e+00 : bf16
    %151 = vector.broadcast %cst_127 : bf16 to vector<32x128xbf16>
    %152 = arith.maximumf %150, %151 : vector<32x128xbf16>
    %c2_128 = arith.constant 2 : index
    %c0_129 = arith.constant 0 : index
    %c0_130 = arith.constant 0 : index
    %153 = vector.load %arg7[%c2_128, %c0_129, %c0_130] : memref<4x8x32xbf16, #tpu.memory_space<vmem>>, vector<1x8x32xbf16>
    %154 = vector.shape_cast %153 : vector<1x8x32xbf16> to vector<8x32xbf16>
    %cst_131 = arith.constant dense<0.000000e+00> : vector<8x128xf32>
    %155 = tpu.matmul %154, %152, %cst_131 {dimension_numbers = #tpu.dot_dimension_numbers<[1], [0], [0], [1], [0, 0, 1, 1], [], []>} : vector<8x32xbf16>, vector<32x128xbf16>, vector<8x128xf32> -> vector<8x128xf32>
    %c2_132 = arith.constant 2 : index
    %c0_133 = arith.constant 0 : index
    %c0_134 = arith.constant 0 : index
    %156 = vector.load %arg8[%c2_132, %c0_133, %c0_134] : memref<4x8x1xf32, #tpu.memory_space<vmem>>, vector<1x8x1xf32>
    %157 = vector.shape_cast %156 : vector<1x8x1xf32> to vector<8x1xf32>
    %158 = vector.broadcast %157 : vector<8x1xf32> to vector<8x128xf32>
    %159 = arith.addf %155, %158 : vector<8x128xf32>
    %160 = arith.addf %54, %159 : vector<8x128xf32>
    %c3 = arith.constant 3 : index
    %c0_135 = arith.constant 0 : index
    %c0_136 = arith.constant 0 : index
    %161 = vector.load %arg3[%c3, %c0_135, %c0_136] : memref<4x32x8xbf16, #tpu.memory_space<vmem>>, vector<1x32x8xbf16>
    %162 = vector.shape_cast %161 : vector<1x32x8xbf16> to vector<32x8xbf16>
    %163 = arith.truncf %160 : vector<8x128xf32> to vector<8x128xbf16>
    %cst_137 = arith.constant dense<0.000000e+00> : vector<32x128xf32>
    %164 = tpu.matmul %162, %163, %cst_137 {dimension_numbers = #tpu.dot_dimension_numbers<[1], [0], [0], [1], [0, 0, 1, 1], [], []>} : vector<32x8xbf16>, vector<8x128xbf16>, vector<32x128xf32> -> vector<32x128xf32>
    %c3_138 = arith.constant 3 : index
    %c0_139 = arith.constant 0 : index
    %c0_140 = arith.constant 0 : index
    %165 = vector.load %arg4[%c3_138, %c0_139, %c0_140] : memref<4x32x1xf32, #tpu.memory_space<vmem>>, vector<1x32x1xf32>
    %166 = vector.shape_cast %165 : vector<1x32x1xf32> to vector<32x1xf32>
    %167 = arith.truncf %164 : vector<32x128xf32> to vector<32x128xbf16>
    %168 = arith.truncf %166 : vector<32x1xf32> to vector<32x1xbf16>
    %169 = vector.broadcast %168 : vector<32x1xbf16> to vector<32x128xbf16>
    %170 = arith.addf %167, %169 : vector<32x128xbf16>
    %cst_141 = arith.constant 0.000000e+00 : bf16
    %171 = vector.broadcast %cst_141 : bf16 to vector<32x128xbf16>
    %172 = arith.maximumf %170, %171 : vector<32x128xbf16>
    %c3_142 = arith.constant 3 : index
    %c0_143 = arith.constant 0 : index
    %c0_144 = arith.constant 0 : index
    %c0_145 = arith.constant 0 : index
    %173 = vector.load %arg5[%c3_142, %c0_143, %c0_144, %c0_145] : memref<4x3x32x32xbf16, #tpu.memory_space<vmem>>, vector<1x1x32x32xbf16>
    %174 = vector.shape_cast %173 : vector<1x1x32x32xbf16> to vector<32x32xbf16>
    %cst_146 = arith.constant dense<0.000000e+00> : vector<32x128xf32>
    %175 = tpu.matmul %174, %172, %cst_146 {dimension_numbers = #tpu.dot_dimension_numbers<[1], [0], [0], [1], [0, 0, 1, 1], [], []>} : vector<32x32xbf16>, vector<32x128xbf16>, vector<32x128xf32> -> vector<32x128xf32>
    %c3_147 = arith.constant 3 : index
    %c0_148 = arith.constant 0 : index
    %c0_149 = arith.constant 0 : index
    %c0_150 = arith.constant 0 : index
    %176 = vector.load %arg6[%c3_147, %c0_148, %c0_149, %c0_150] : memref<4x3x32x1xf32, #tpu.memory_space<vmem>>, vector<1x1x32x1xf32>
    %177 = vector.shape_cast %176 : vector<1x1x32x1xf32> to vector<32x1xf32>
    %178 = arith.truncf %175 : vector<32x128xf32> to vector<32x128xbf16>
    %179 = arith.truncf %177 : vector<32x1xf32> to vector<32x1xbf16>
    %180 = vector.broadcast %179 : vector<32x1xbf16> to vector<32x128xbf16>
    %181 = arith.addf %178, %180 : vector<32x128xbf16>
    %cst_151 = arith.constant 0.000000e+00 : bf16
    %182 = vector.broadcast %cst_151 : bf16 to vector<32x128xbf16>
    %183 = arith.maximumf %181, %182 : vector<32x128xbf16>
    %c3_152 = arith.constant 3 : index
    %c1_153 = arith.constant 1 : index
    %c0_154 = arith.constant 0 : index
    %c0_155 = arith.constant 0 : index
    %184 = vector.load %arg5[%c3_152, %c1_153, %c0_154, %c0_155] : memref<4x3x32x32xbf16, #tpu.memory_space<vmem>>, vector<1x1x32x32xbf16>
    %185 = vector.shape_cast %184 : vector<1x1x32x32xbf16> to vector<32x32xbf16>
    %cst_156 = arith.constant dense<0.000000e+00> : vector<32x128xf32>
    %186 = tpu.matmul %185, %183, %cst_156 {dimension_numbers = #tpu.dot_dimension_numbers<[1], [0], [0], [1], [0, 0, 1, 1], [], []>} : vector<32x32xbf16>, vector<32x128xbf16>, vector<32x128xf32> -> vector<32x128xf32>
    %c3_157 = arith.constant 3 : index
    %c1_158 = arith.constant 1 : index
    %c0_159 = arith.constant 0 : index
    %c0_160 = arith.constant 0 : index
    %187 = vector.load %arg6[%c3_157, %c1_158, %c0_159, %c0_160] : memref<4x3x32x1xf32, #tpu.memory_space<vmem>>, vector<1x1x32x1xf32>
    %188 = vector.shape_cast %187 : vector<1x1x32x1xf32> to vector<32x1xf32>
    %189 = arith.truncf %186 : vector<32x128xf32> to vector<32x128xbf16>
    %190 = arith.truncf %188 : vector<32x1xf32> to vector<32x1xbf16>
    %191 = vector.broadcast %190 : vector<32x1xbf16> to vector<32x128xbf16>
    %192 = arith.addf %189, %191 : vector<32x128xbf16>
    %cst_161 = arith.constant 0.000000e+00 : bf16
    %193 = vector.broadcast %cst_161 : bf16 to vector<32x128xbf16>
    %194 = arith.maximumf %192, %193 : vector<32x128xbf16>
    %c3_162 = arith.constant 3 : index
    %c2_163 = arith.constant 2 : index
    %c0_164 = arith.constant 0 : index
    %c0_165 = arith.constant 0 : index
    %195 = vector.load %arg5[%c3_162, %c2_163, %c0_164, %c0_165] : memref<4x3x32x32xbf16, #tpu.memory_space<vmem>>, vector<1x1x32x32xbf16>
    %196 = vector.shape_cast %195 : vector<1x1x32x32xbf16> to vector<32x32xbf16>
    %cst_166 = arith.constant dense<0.000000e+00> : vector<32x128xf32>
    %197 = tpu.matmul %196, %194, %cst_166 {dimension_numbers = #tpu.dot_dimension_numbers<[1], [0], [0], [1], [0, 0, 1, 1], [], []>} : vector<32x32xbf16>, vector<32x128xbf16>, vector<32x128xf32> -> vector<32x128xf32>
    %c3_167 = arith.constant 3 : index
    %c2_168 = arith.constant 2 : index
    %c0_169 = arith.constant 0 : index
    %c0_170 = arith.constant 0 : index
    %198 = vector.load %arg6[%c3_167, %c2_168, %c0_169, %c0_170] : memref<4x3x32x1xf32, #tpu.memory_space<vmem>>, vector<1x1x32x1xf32>
    %199 = vector.shape_cast %198 : vector<1x1x32x1xf32> to vector<32x1xf32>
    %200 = arith.truncf %197 : vector<32x128xf32> to vector<32x128xbf16>
    %201 = arith.truncf %199 : vector<32x1xf32> to vector<32x1xbf16>
    %202 = vector.broadcast %201 : vector<32x1xbf16> to vector<32x128xbf16>
    %203 = arith.addf %200, %202 : vector<32x128xbf16>
    %cst_171 = arith.constant 0.000000e+00 : bf16
    %204 = vector.broadcast %cst_171 : bf16 to vector<32x128xbf16>
    %205 = arith.maximumf %203, %204 : vector<32x128xbf16>
    %c3_172 = arith.constant 3 : index
    %c0_173 = arith.constant 0 : index
    %c0_174 = arith.constant 0 : index
    %206 = vector.load %arg7[%c3_172, %c0_173, %c0_174] : memref<4x8x32xbf16, #tpu.memory_space<vmem>>, vector<1x8x32xbf16>
    %207 = vector.shape_cast %206 : vector<1x8x32xbf16> to vector<8x32xbf16>
    %cst_175 = arith.constant dense<0.000000e+00> : vector<8x128xf32>
    %208 = tpu.matmul %207, %205, %cst_175 {dimension_numbers = #tpu.dot_dimension_numbers<[1], [0], [0], [1], [0, 0, 1, 1], [], []>} : vector<8x32xbf16>, vector<32x128xbf16>, vector<8x128xf32> -> vector<8x128xf32>
    %c3_176 = arith.constant 3 : index
    %c0_177 = arith.constant 0 : index
    %c0_178 = arith.constant 0 : index
    %209 = vector.load %arg8[%c3_176, %c0_177, %c0_178] : memref<4x8x1xf32, #tpu.memory_space<vmem>>, vector<1x8x1xf32>
    %210 = vector.shape_cast %209 : vector<1x8x1xf32> to vector<8x1xf32>
    %211 = vector.broadcast %210 : vector<8x1xf32> to vector<8x128xf32>
    %212 = arith.addf %208, %211 : vector<8x128xf32>
    %213 = arith.addf %107, %212 : vector<8x128xf32>
    %c0_179 = arith.constant 0 : index
    %c0_180 = arith.constant 0 : index
    %214 = vector.load %arg9[%c0_179, %c0_180] : memref<8x1xf32, #tpu.memory_space<vmem>>, vector<8x1xf32>
    %215 = vector.broadcast %214 : vector<8x1xf32> to vector<8x128xf32>
    %216 = arith.mulf %160, %215 : vector<8x128xf32>
    %c0_181 = arith.constant 0 : index
    %c0_182 = arith.constant 0 : index
    %217 = vector.load %arg10[%c0_181, %c0_182] : memref<8x1xf32, #tpu.memory_space<vmem>>, vector<8x1xf32>
    %218 = vector.broadcast %217 : vector<8x1xf32> to vector<8x128xf32>
    %219 = arith.mulf %213, %218 : vector<8x128xf32>
    %220 = math.absf %216 : vector<8x128xf32>
    %221 = math.absf %219 : vector<8x128xf32>
    %cst_183 = arith.constant 0.000000e+00 : f32
    %222 = vector.broadcast %cst_183 : f32 to vector<8x128xf32>
    %223 = arith.subf %222, %220 : vector<8x128xf32>
    %224 = math.exp %223 : vector<8x128xf32>
    %225 = math.log1p %224 : vector<8x128xf32>
    %cst_184 = arith.constant 2.000000e+00 : f32
    %226 = vector.broadcast %cst_184 : f32 to vector<8x128xf32>
    %227 = arith.mulf %226, %225 : vector<8x128xf32>
    %228 = arith.addf %220, %227 : vector<8x128xf32>
    %cst_185 = arith.constant 0.000000e+00 : f32
    %229 = vector.broadcast %cst_185 : f32 to vector<8x128xf32>
    %230 = arith.subf %229, %228 : vector<8x128xf32>
    %cst_186 = arith.constant 0.000000e+00 : f32
    %231 = vector.broadcast %cst_186 : f32 to vector<8x128xf32>
    %232 = arith.subf %231, %221 : vector<8x128xf32>
    %233 = math.exp %232 : vector<8x128xf32>
    %234 = math.log1p %233 : vector<8x128xf32>
    %cst_187 = arith.constant 2.000000e+00 : f32
    %235 = vector.broadcast %cst_187 : f32 to vector<8x128xf32>
    %236 = arith.mulf %235, %234 : vector<8x128xf32>
    %237 = arith.addf %221, %236 : vector<8x128xf32>
    %238 = arith.subf %230, %237 : vector<8x128xf32>
    %cst_188 = arith.constant dense<0.000000e+00> : vector<128xf32>
    %239 = vector.multi_reduction <add>, %238, %cst_188 [0] : vector<8x128xf32> to vector<128xf32>
    %240 = vector.shape_cast %239 : vector<128xf32> to vector<1x128xf32>
    %c0_189 = arith.constant 0 : index
    %c0_190 = arith.constant 0 : index
    %241 = vector.load %arg11[%c0_189, %c0_190] : memref<1x128xf32, #tpu.memory_space<vmem>>, vector<1x128xf32>
    tpu.vector_store %arg11[%c0_189, %c0_190], %240 {strides = array<i32>} : memref<1x128xf32, #tpu.memory_space<vmem>>, vector<1x128xf32>,
    return
  }
  func.func @transform_0(%arg0: i32) -> (i32, i32) {
    %c0_i32 = arith.constant 0 : i32
    %c0_i32_0 = arith.constant 0 : i32
    return %c0_i32, %arg0 : i32, i32
  }
  func.func @transform_1(%arg0: i32) -> (i32, i32) {
    %c0_i32 = arith.constant 0 : i32
    %c0_i32_0 = arith.constant 0 : i32
    return %c0_i32, %arg0 : i32, i32
  }
  func.func @transform_2(%arg0: i32) -> (i32, i32, i32) {
    %c0_i32 = arith.constant 0 : i32
    %c0_i32_0 = arith.constant 0 : i32
    %c0_i32_1 = arith.constant 0 : i32
    %c0_i32_2 = arith.constant 0 : i32
    return %c0_i32, %c0_i32_0, %c0_i32_1 : i32, i32, i32
  }
  func.func @transform_3(%arg0: i32) -> (i32, i32, i32) {
    %c0_i32 = arith.constant 0 : i32
    %c0_i32_0 = arith.constant 0 : i32
    %c0_i32_1 = arith.constant 0 : i32
    %c0_i32_2 = arith.constant 0 : i32
    return %c0_i32, %c0_i32_0, %c0_i32_1 : i32, i32, i32
  }
  func.func @transform_4(%arg0: i32) -> (i32, i32, i32, i32) {
    %c0_i32 = arith.constant 0 : i32
    %c0_i32_0 = arith.constant 0 : i32
    %c0_i32_1 = arith.constant 0 : i32
    %c0_i32_2 = arith.constant 0 : i32
    %c0_i32_3 = arith.constant 0 : i32
    return %c0_i32, %c0_i32_0, %c0_i32_1, %c0_i32_2 : i32, i32, i32, i32
  }
  func.func @transform_5(%arg0: i32) -> (i32, i32, i32, i32) {
    %c0_i32 = arith.constant 0 : i32
    %c0_i32_0 = arith.constant 0 : i32
    %c0_i32_1 = arith.constant 0 : i32
    %c0_i32_2 = arith.constant 0 : i32
    %c0_i32_3 = arith.constant 0 : i32
    return %c0_i32, %c0_i32_0, %c0_i32_1, %c0_i32_2 : i32, i32, i32, i32
  }
  func.func @transform_6(%arg0: i32) -> (i32, i32, i32) {
    %c0_i32 = arith.constant 0 : i32
    %c0_i32_0 = arith.constant 0 : i32
    %c0_i32_1 = arith.constant 0 : i32
    %c0_i32_2 = arith.constant 0 : i32
    return %c0_i32, %c0_i32_0, %c0_i32_1 : i32, i32, i32
  }
  func.func @transform_7(%arg0: i32) -> (i32, i32, i32) {
    %c0_i32 = arith.constant 0 : i32
    %c0_i32_0 = arith.constant 0 : i32
    %c0_i32_1 = arith.constant 0 : i32
    %c0_i32_2 = arith.constant 0 : i32
    return %c0_i32, %c0_i32_0, %c0_i32_1 : i32, i32, i32
  }
  func.func @transform_8(%arg0: i32) -> (i32, i32) {
    %c0_i32 = arith.constant 0 : i32
    %c0_i32_0 = arith.constant 0 : i32
    %c0_i32_1 = arith.constant 0 : i32
    return %c0_i32, %c0_i32_0 : i32, i32
  }
  func.func @transform_9(%arg0: i32) -> (i32, i32) {
    %c0_i32 = arith.constant 0 : i32
    %c0_i32_0 = arith.constant 0 : i32
    %c0_i32_1 = arith.constant 0 : i32
    return %c0_i32, %c0_i32_0 : i32, i32
  }
  func.func @transform_10(%arg0: i32) -> (i32, i32) {
    %c0_i32 = arith.constant 0 : i32
    %c0_i32_0 = arith.constant 0 : i32
    return %c0_i32, %arg0 : i32, i32
  }
}

</mosaic_0001>

<llo_original>
// kernel: tpu_custom_call.1
$region0: #{tpu_custom_call.1}
  #allocation0 [shape = 'u32[]', space=smem, size = 0x4, offset = 0x4, fixed_abs, tag = 'smem constant byte address 0x4 - core index']
  #allocation1 [shape = 'u32[144,128]{1,0:T(1,128)}', space=vmem, size = 0x12000, scoped, tag = 'internal scratch']
  %s0 = inlined_call_operand.vmem [shape: f32[8,256], index: 0, kind: input, shape index: {}]
  %s1 = inlined_call_operand.vmem [shape: f32[8,256], index: 1, kind: input, shape index: {}]
  %s2 = inlined_call_operand.vmem [shape: bf16[4,32,8], index: 2, kind: input, shape index: {}]
  %s3 = inlined_call_operand.vmem [shape: f32[4,32,1], index: 3, kind: input, shape index: {}]
  %s4 = inlined_call_operand.vmem [shape: bf16[4,3,32,32], index: 4, kind: input, shape index: {}]
  %s5 = inlined_call_operand.vmem [shape: f32[4,3,32,1], index: 5, kind: input, shape index: {}]
  %s6 = inlined_call_operand.vmem [shape: bf16[4,8,32], index: 6, kind: input, shape index: {}]
  %s7 = inlined_call_operand.vmem [shape: f32[4,8,1], index: 7, kind: input, shape index: {}]
  %s8 = inlined_call_operand.vmem [shape: f32[8,1], index: 8, kind: input, shape index: {}]
  %s9 = inlined_call_operand.vmem [shape: f32[8,1], index: 9, kind: input, shape index: {}]
  %s10 = inlined_call_operand.hbm [shape: f32[1,256], index: 10, kind: output, shape index: {}]
  %s11 = sld [smem:[#allocation0]]
  $region73: #{tpu_custom_call.1} parent=0
    _
  %s13 = ssub.s32 1, %s11
  %s14 = scalar_select 0, %s13, %s11
  $region1: #{tpu_custom_call.1} parent=0
    #allocation2 [shape = 'u8[1024]{0}', space=vmem, size = 0x400, scoped, tag = 'output window, operand 0']
    #allocation3 [shape = 's32[2]{0}', space=sflag, size = 0x8, scoped, tag = 'scoped memory for tpu_custom_call.1']
    %15 = vsyncpa [#allocation3], 0
    %s16 = scalar_lea.sflag [#allocation3], 1
    %17 = vsyncpa %s16, 0
    loop: start=0, step=1, limit=4
    $region2: #{tpu_custom_call.1} parent=1 // loop_pre_header
      _
    $region3: #{tpu_custom_call.1} parent=1 // loop_header
      %s19 = sphi 0, %s23
      %p20 = scmp.ge.s32.totalorder %s19, 4
      %s29 = sphi 0, %s31
      %s32 = sphi 0, %s29
      %s33 = sphi 0, %s32
      %s49 = sphi 0, %s33
      %s55 = sphi 0, %s57
      %s58 = sphi 0, %s55
      %s59 = sphi 0, %s58
      %s75 = sphi 0, %s59
      %s79 = sphi 0, %s79
      %s81 = sphi 0, %s79
      %s82 = sphi 0, %s81
      %s96 = sphi 0, %s82
      %s100 = sphi 0, %s100
      %s102 = sphi 0, %s100
      %s103 = sphi 0, %s102
      %s117 = sphi 0, %s103
      %s121 = sphi 0, %s121
      %s123 = sphi 0, %s121
      %s124 = sphi 0, %s123
      %s138 = sphi 0, %s124
      %s142 = sphi 0, %s142
      %s144 = sphi 0, %s142
      %s145 = sphi 0, %s144
      %s159 = sphi 0, %s145
      %s163 = sphi 0, %s163
      %s165 = sphi 0, %s163
      %s166 = sphi 0, %s165
      %s180 = sphi 0, %s166
      %s184 = sphi 0, %s184
      %s186 = sphi 0, %s184
      %s187 = sphi 0, %s186
      %s201 = sphi 0, %s187
      %s205 = sphi 0, %s205
      %s207 = sphi 0, %s205
      %s208 = sphi 0, %s207
      %s222 = sphi 0, %s208
      %s226 = sphi 0, %s226
      %s228 = sphi 0, %s226
      %s229 = sphi 0, %s228
      %s243 = sphi 0, %s229
      %s249 = sphi 0, %s251
      %s252 = sphi 0, %s249
      %s253 = sphi 0, %s252
      %s269 = sphi 0, %s253
    $region4: #{tpu_custom_call.1} parent=1 // loop_header_branch
      %22 = sbr.rel (%p20) target = $region8
    $region5: #{tpu_custom_call.1} parent=1 // loop_body
      %s24 = ssub.s32 %s19, 1
      %s25 = ssub.s32 %s19, 2
      %s26 = sadd.s32 %s19, 1
      %s27 = ssub.s32 %s19, %s26
      %p28 = scmp.eq.s32.totalorder %s27, 0
      %s30 = sadd.s32 %s29, 1
      %s31 = scalar_select %p28, %s29, %s30
      %p34 = pneg %p28
      %p35 = scmp.eq.s32.totalorder %s19, 1
      %p36 = por %p34, %p35
      %p37 = scmp.ne.s32.totalorder %s29, %s32
      %p38 = scmp.eq.s32.totalorder %s19, 0
      %p39 = por %p37, %p38
      %p40 = scmp.ne.s32.totalorder %s29, %s32
      %p41 = scmp.eq.s32.totalorder %s24, 1
      %p42 = por %p40, %p41
      %p43 = scmp.ne.s32.totalorder %s32, %s33
      %p44 = scmp.eq.s32.totalorder %s24, 0
      %p45 = por %p43, %p44
      %p46 = scmp.ne.s32.totalorder %s32, %s33
      %p47 = scmp.eq.s32.totalorder %s25, 1
      %p48 = por %p46, %p47
      %p50 = scmp.ne.s32.totalorder %s33, %s49
      %p51 = scmp.eq.s32.totalorder %s25, 0
      %p52 = por %p50, %p51
      %s53 = ssub.s32 %s19, %s26
      %p54 = scmp.eq.s32.totalorder %s53, 0
      %s56 = sadd.s32 %s55, 1
      %s57 = scalar_select %p54, %s55, %s56
      %p60 = pneg %p54
      %p61 = scmp.eq.s32.totalorder %s19, 1
      %p62 = por %p60, %p61
      %p63 = scmp.ne.s32.totalorder %s55, %s58
      %p64 = scmp.eq.s32.totalorder %s19, 0
      %p65 = por %p63, %p64
      %p66 = scmp.ne.s32.totalorder %s55, %s58
      %p67 = scmp.eq.s32.totalorder %s24, 1
      %p68 = por %p66, %p67
      %p69 = scmp.ne.s32.totalorder %s58, %s59
      %p70 = scmp.eq.s32.totalorder %s24, 0
      %p71 = por %p69, %p70
      %p72 = scmp.ne.s32.totalorder %s58, %s59
      %p73 = scmp.eq.s32.totalorder %s25, 1
      %p74 = por %p72, %p73
      %p76 = scmp.ne.s32.totalorder %s59, %s75
      %p77 = scmp.eq.s32.totalorder %s25, 0
      %p78 = por %p76, %p77
      %s80 = sadd.s32 %s79, 1
      %p83 = scmp.eq.s32.totalorder %s19, 1
      %p84 = scmp.ne.s32.totalorder %s79, %s81
      %p85 = scmp.eq.s32.totalorder %s19, 0
      %p86 = por %p84, %p85
      %p87 = scmp.ne.s32.totalorder %s79, %s81
      %p88 = scmp.eq.s32.totalorder %s24, 1
      %p89 = por %p87, %p88
      %p90 = scmp.ne.s32.totalorder %s81, %s82
      %p91 = scmp.eq.s32.totalorder %s24, 0
      %p92 = por %p90, %p91
      %p93 = scmp.ne.s32.totalorder %s81, %s82
      %p94 = scmp.eq.s32.totalorder %s25, 1
      %p95 = por %p93, %p94
      %p97 = scmp.ne.s32.totalorder %s82, %s96
      %p98 = scmp.eq.s32.totalorder %s25, 0
      %p99 = por %p97, %p98
      %s101 = sadd.s32 %s100, 1
      %p104 = scmp.eq.s32.totalorder %s19, 1
      %p105 = scmp.ne.s32.totalorder %s100, %s102
      %p106 = scmp.eq.s32.totalorder %s19, 0
      %p107 = por %p105, %p106
      %p108 = scmp.ne.s32.totalorder %s100, %s102
      %p109 = scmp.eq.s32.totalorder %s24, 1
      %p110 = por %p108, %p109
      %p111 = scmp.ne.s32.totalorder %s102, %s103
      %p112 = scmp.eq.s32.totalorder %s24, 0
      %p113 = por %p111, %p112
      %p114 = scmp.ne.s32.totalorder %s102, %s103
      %p115 = scmp.eq.s32.totalorder %s25, 1
      %p116 = por %p114, %p115
      %p118 = scmp.ne.s32.totalorder %s103, %s117
      %p119 = scmp.eq.s32.totalorder %s25, 0
      %p120 = por %p118, %p119
      %s122 = sadd.s32 %s121, 1
      %p125 = scmp.eq.s32.totalorder %s19, 1
      %p126 = scmp.ne.s32.totalorder %s121, %s123
      %p127 = scmp.eq.s32.totalorder %s19, 0
      %p128 = por %p126, %p127
      %p129 = scmp.ne.s32.totalorder %s121, %s123
      %p130 = scmp.eq.s32.totalorder %s24, 1
      %p131 = por %p129, %p130
      %p132 = scmp.ne.s32.totalorder %s123, %s124
      %p133 = scmp.eq.s32.totalorder %s24, 0
      %p134 = por %p132, %p133
      %p135 = scmp.ne.s32.totalorder %s123, %s124
      %p136 = scmp.eq.s32.totalorder %s25, 1
      %p137 = por %p135, %p136
      %p139 = scmp.ne.s32.totalorder %s124, %s138
      %p140 = scmp.eq.s32.totalorder %s25, 0
      %p141 = por %p139, %p140
      %s143 = sadd.s32 %s142, 1
      %p146 = scmp.eq.s32.totalorder %s19, 1
      %p147 = scmp.ne.s32.totalorder %s142, %s144
      %p148 = scmp.eq.s32.totalorder %s19, 0
      %p149 = por %p147, %p148
      %p150 = scmp.ne.s32.totalorder %s142, %s144
      %p151 = scmp.eq.s32.totalorder %s24, 1
      %p152 = por %p150, %p151
      %p153 = scmp.ne.s32.totalorder %s144, %s145
      %p154 = scmp.eq.s32.totalorder %s24, 0
      %p155 = por %p153, %p154
      %p156 = scmp.ne.s32.totalorder %s144, %s145
      %p157 = scmp.eq.s32.totalorder %s25, 1
      %p158 = por %p156, %p157
      %p160 = scmp.ne.s32.totalorder %s145, %s159
      %p161 = scmp.eq.s32.totalorder %s25, 0
      %p162 = por %p160, %p161
      %s164 = sadd.s32 %s163, 1
      %p167 = scmp.eq.s32.totalorder %s19, 1
      %p168 = scmp.ne.s32.totalorder %s163, %s165
      %p169 = scmp.eq.s32.totalorder %s19, 0
      %p170 = por %p168, %p169
      %p171 = scmp.ne.s32.totalorder %s163, %s165
      %p172 = scmp.eq.s32.totalorder %s24, 1
      %p173 = por %p171, %p172
      %p174 = scmp.ne.s32.totalorder %s165, %s166
      %p175 = scmp.eq.s32.totalorder %s24, 0
      %p176 = por %p174, %p175
      %p177 = scmp.ne.s32.totalorder %s165, %s166
      %p178 = scmp.eq.s32.totalorder %s25, 1
      %p179 = por %p177, %p178
      %p181 = scmp.ne.s32.totalorder %s166, %s180
      %p182 = scmp.eq.s32.totalorder %s25, 0
      %p183 = por %p181, %p182
      %s185 = sadd.s32 %s184, 1
      %p188 = scmp.eq.s32.totalorder %s19, 1
      %p189 = scmp.ne.s32.totalorder %s184, %s186
      %p190 = scmp.eq.s32.totalorder %s19, 0
      %p191 = por %p189, %p190
      %p192 = scmp.ne.s32.totalorder %s184, %s186
      %p193 = scmp.eq.s32.totalorder %s24, 1
      %p194 = por %p192, %p193
      %p195 = scmp.ne.s32.totalorder %s186, %s187
      %p196 = scmp.eq.s32.totalorder %s24, 0
      %p197 = por %p195, %p196
      %p198 = scmp.ne.s32.totalorder %s186, %s187
      %p199 = scmp.eq.s32.totalorder %s25, 1
      %p200 = por %p198, %p199
      %p202 = scmp.ne.s32.totalorder %s187, %s201
      %p203 = scmp.eq.s32.totalorder %s25, 0
      %p204 = por %p202, %p203
      %s206 = sadd.s32 %s205, 1
      %p209 = scmp.eq.s32.totalorder %s19, 1
      %p210 = scmp.ne.s32.totalorder %s205, %s207
      %p211 = scmp.eq.s32.totalorder %s19, 0
      %p212 = por %p210, %p211
      %p213 = scmp.ne.s32.totalorder %s205, %s207
      %p214 = scmp.eq.s32.totalorder %s24, 1
      %p215 = por %p213, %p214
      %p216 = scmp.ne.s32.totalorder %s207, %s208
      %p217 = scmp.eq.s32.totalorder %s24, 0
      %p218 = por %p216, %p217
      %p219 = scmp.ne.s32.totalorder %s207, %s208
      %p220 = scmp.eq.s32.totalorder %s25, 1
      %p221 = por %p219, %p220
      %p223 = scmp.ne.s32.totalorder %s208, %s222
      %p224 = scmp.eq.s32.totalorder %s25, 0
      %p225 = por %p223, %p224
      %s227 = sadd.s32 %s226, 1
      %p230 = scmp.eq.s32.totalorder %s19, 1
      %p231 = scmp.ne.s32.totalorder %s226, %s228
      %p232 = scmp.eq.s32.totalorder %s19, 0
      %p233 = por %p231, %p232
      %p234 = scmp.ne.s32.totalorder %s226, %s228
      %p235 = scmp.eq.s32.totalorder %s24, 1
      %p236 = por %p234, %p235
      %p237 = scmp.ne.s32.totalorder %s228, %s229
      %p238 = scmp.eq.s32.totalorder %s24, 0
      %p239 = por %p237, %p238
      %p240 = scmp.ne.s32.totalorder %s228, %s229
      %p241 = scmp.eq.s32.totalorder %s25, 1
      %p242 = por %p240, %p241
      %p244 = scmp.ne.s32.totalorder %s229, %s243
      %p245 = scmp.eq.s32.totalorder %s25, 0
      %p246 = por %p244, %p245
      %s247 = ssub.s32 %s19, %s26
      %p248 = scmp.eq.s32.totalorder %s247, 0
      %s250 = sadd.s32 %s249, 1
      %s251 = scalar_select %p248, %s249, %s250
      %p254 = pneg %p248
      %p255 = scmp.eq.s32.totalorder %s19, 1
      %p256 = por %p254, %p255
      %p257 = scmp.ne.s32.totalorder %s249, %s252
      %p258 = scmp.eq.s32.totalorder %s19, 0
      %p259 = por %p257, %p258
      %p260 = scmp.ne.s32.totalorder %s249, %s252
      %p261 = scmp.eq.s32.totalorder %s24, 1
      %p262 = por %p260, %p261
      %p263 = scmp.ne.s32.totalorder %s252, %s253
      %p264 = scmp.eq.s32.totalorder %s24, 0
      %p265 = por %p263, %p264
      %p266 = scmp.ne.s32.totalorder %s252, %s253
      %p267 = scmp.eq.s32.totalorder %s25, 1
      %p268 = por %p266, %p267
      %p270 = scmp.ne.s32.totalorder %s253, %s269
      %p271 = scmp.eq.s32.totalorder %s25, 0
      %p272 = por %p270, %p271
      %p273 = scmp.le.s32.totalorder 1, %s19
      %p274 = scmp.lt.s32.totalorder %s19, 3
      %p275 = pnand %p273, %p274
      %p276 = pneg %p275
      // Predicated region
      $region9: #{tpu_custom_call.1} parent=5 // pred_check
        _
      $region10: #{tpu_custom_call.1} parent=5 // pred_check_branch
        %278 = sbr.rel (%p275) target = $region12
      $region11: #{tpu_custom_call.1} parent=5 // pred_region
        %s279 = ssub.s32 %s19, 1
        // Predicated region
        $region13: #{tpu_custom_call.1} parent=11 // pred_check
          %p280 = pneg %p92
        $region14: #{tpu_custom_call.1} parent=11 // pred_check_branch
          %282 = sbr.rel (%p280) target = $region16
        $region15: #{tpu_custom_call.1} parent=11 // pred_region
          _
        $region16: #{tpu_custom_call.1} parent=11 // pred_fallthru
          _
        // Predicated region
        $region17: #{tpu_custom_call.1} parent=11 // pred_check
          %p283 = pneg %p113
        $region18: #{tpu_custom_call.1} parent=11 // pred_check_branch
          %285 = sbr.rel (%p283) target = $region20
        $region19: #{tpu_custom_call.1} parent=11 // pred_region
          _
        $region20: #{tpu_custom_call.1} parent=11 // pred_fallthru
          _
        // Predicated region
        $region21: #{tpu_custom_call.1} parent=11 // pred_check
          %p286 = pneg %p134
        $region22: #{tpu_custom_call.1} parent=11 // pred_check_branch
          %288 = sbr.rel (%p286) target = $region24
        $region23: #{tpu_custom_call.1} parent=11 // pred_region
          _
        $region24: #{tpu_custom_call.1} parent=11 // pred_fallthru
          _
        // Predicated region
        $region25: #{tpu_custom_call.1} parent=11 // pred_check
          %p289 = pneg %p155
        $region26: #{tpu_custom_call.1} parent=11 // pred_check_branch
          %291 = sbr.rel (%p289) target = $region28
        $region27: #{tpu_custom_call.1} parent=11 // pred_region
          _
        $region28: #{tpu_custom_call.1} parent=11 // pred_fallthru
          _
        // Predicated region
        $region29: #{tpu_custom_call.1} parent=11 // pred_check
          %p292 = pneg %p176
        $region30: #{tpu_custom_call.1} parent=11 // pred_check_branch
          %294 = sbr.rel (%p292) target = $region32
        $region31: #{tpu_custom_call.1} parent=11 // pred_region
          _
        $region32: #{tpu_custom_call.1} parent=11 // pred_fallthru
          _
        // Predicated region
        $region33: #{tpu_custom_call.1} parent=11 // pred_check
          %p295 = pneg %p197
        $region34: #{tpu_custom_call.1} parent=11 // pred_check_branch
          %297 = sbr.rel (%p295) target = $region36
        $region35: #{tpu_custom_call.1} parent=11 // pred_region
          _
        $region36: #{tpu_custom_call.1} parent=11 // pred_fallthru
          _
        // Predicated region
        $region37: #{tpu_custom_call.1} parent=11 // pred_check
          %p298 = pneg %p218
        $region38: #{tpu_custom_call.1} parent=11 // pred_check_branch
          %300 = sbr.rel (%p298) target = $region40
        $region39: #{tpu_custom_call.1} parent=11 // pred_region
          _
        $region40: #{tpu_custom_call.1} parent=11 // pred_fallthru
          _
        // Predicated region
        $region41: #{tpu_custom_call.1} parent=11 // pred_check
          %p301 = pneg %p239
        $region42: #{tpu_custom_call.1} parent=11 // pred_check_branch
          %303 = sbr.rel (%p301) target = $region44
        $region43: #{tpu_custom_call.1} parent=11 // pred_region
          _
        $region44: #{tpu_custom_call.1} parent=11 // pred_fallthru
          _
      $region12: #{tpu_custom_call.1} parent=5 // pred_fallthru
        _
      %p304 = scmp.lt.s32.totalorder %s19, 2
      // Predicated region
      $region45: #{tpu_custom_call.1} parent=5 // pred_check
        %p305 = pneg %p304
      $region46: #{tpu_custom_call.1} parent=5 // pred_check_branch
        %307 = sbr.rel (%p305) target = $region48
      $region47: #{tpu_custom_call.1} parent=5 // pred_region
        // Predicated region
        $region49: #{tpu_custom_call.1} parent=47 // pred_check
          %p308 = pneg %p39
        $region50: #{tpu_custom_call.1} parent=47 // pred_check_branch
          %310 = sbr.rel (%p308) target = $region52
        $region51: #{tpu_custom_call.1} parent=47 // pred_region
          %p311 = scmp.lt.s32.totalorder %s19, 1
          %s312 = scalar_select %p311, %s19, 1
          %s313 = smul.addr %s312, 8
          %s314 = scalar_lea.vmem %s0, %s313
        $region52: #{tpu_custom_call.1} parent=47 // pred_fallthru
          _
        // Predicated region
        $region53: #{tpu_custom_call.1} parent=47 // pred_check
          %p315 = pneg %p65
        $region54: #{tpu_custom_call.1} parent=47 // pred_check_branch
          %317 = sbr.rel (%p315) target = $region56
        $region55: #{tpu_custom_call.1} parent=47 // pred_region
          %p318 = scmp.lt.s32.totalorder %s19, 1
          %s319 = scalar_select %p318, %s19, 1
          %s320 = smul.addr %s319, 8
          %s321 = scalar_lea.vmem %s1, %s320
        $region56: #{tpu_custom_call.1} parent=47 // pred_fallthru
          _
      $region48: #{tpu_custom_call.1} parent=5 // pred_fallthru
        _
      %p322 = scmp.le.s32.totalorder 1, %s19
      %p323 = scmp.lt.s32.totalorder %s19, 3
      %p324 = pnand %p322, %p323
      %p325 = pneg %p324
      // Predicated region
      $region57: #{tpu_custom_call.1} parent=5 // pred_check
        _
      $region58: #{tpu_custom_call.1} parent=5 // pred_check_branch
        %327 = sbr.rel (%p324) target = $region60
      $region59: #{tpu_custom_call.1} parent=5 // pred_region
        %s328 = ssub.s32 %s19, 1
        %p329 = scmp.lt.s32.totalorder %s24, 1
        %s330 = scalar_select %p329, %s24, 1
        %s331 = smul.addr %s330, 8
        %s332 = scalar_lea.vmem %s0, %s331
        %p333 = pneg %p45
        %p334 = pneg %p42
        %p335 = scmp.lt.s32.totalorder %s24, 1
        %s336 = scalar_select %p335, %s24, 1
        %s337 = smul.addr %s336, 8
        %s338 = scalar_lea.vmem %s1, %s337
        %p339 = pneg %p71
        %p340 = pneg %p68
        %p341 = pneg %p92
        %p342 = pneg %p89
        %p343 = pneg %p113
        %p344 = pneg %p110
        %p345 = pneg %p134
        %p346 = pneg %p131
        %p347 = pneg %p155
        %p348 = pneg %p152
        %p349 = pneg %p176
        %p350 = pneg %p173
        %p351 = pneg %p197
        %p352 = pneg %p194
        %p353 = pneg %p218
        %p354 = pneg %p215
        %p355 = pneg %p239
        %p356 = pneg %p236
        %p357 = pneg %p265
        %p358 = pneg %p262
        %s359 = sand.u32 %s252, 1
        %s360 = scalar_lea.sflag [#allocation3], %s359
        %s361 = sand.u32 %s252, 1
        %s362 = scalar_lea.vmem [#allocation2], %s361
        %p363 = scmp.lt.s32.totalorder %s24, 1
        %s364 = scalar_select %p363, %s24, 1
        %s365 = smul.addr %s364, 8
        %s366 = scalar_lea.vmem %s0, %s365
        %p367 = scmp.lt.s32.totalorder %s24, 1
        %s368 = scalar_select %p367, %s24, 1
        %s369 = smul.addr %s368, 8
        %s370 = scalar_lea.vmem %s1, %s369
        %v372 = vld [vmem:[%s366] sm:$0xff]
        %v373 = vld [vmem:[%s370] sm:$0xff]
        %v374 = vld [vmem:[%s2] sm:$0xf]
        %v375 = vld [vmem:[%s2 + $0x4] sm:$0xf]
        %v376 = vld [vmem:[%s2 + $0x8] sm:$0xf]
        %v377 = vld [vmem:[%s2 + $0xc] sm:$0xf]
        %v378 = vpack.c.bf16 %v373, %v373
        %v383 = vunpack.c.l.b16 %v374
        %v384 = vunpack.c.l.b16 %v375
        %v385 = vunpack.c.l.b16 %v376
        %v386 = vunpack.c.l.b16 %v377
        %v387 = vpack.c.b16 %v384, %v383
        %v388 = vpack.c.b16 %v386, %v385
        %vm389 = vcmask 64512
        %v391 = vsel %vm389, %v387, 0
        %v394 = vsel %vm389, %v388, 0
        %vm396 = vcmask 1043456
        %v398 = vsel %vm396, %v378, 0
        %400 = vmatprep.subr.bf16.mxu0 0
        %401 = vmatpush1.bf16.msra.mxu0 %v398
        %402 = vmatprep.subr.bf16.mxu0 0
        %403 = vmatpush1.bf16.msra.mxu0 0
        %404 = vmatprep.subr.bf16.mxu0 0
        %405 = vmatpush1.bf16.msra.mxu0 0
        %406 = vmatprep.subr.bf16.mxu0 0
        %407 = vmatpush1.bf16.msra.mxu0 0
        %408 = vmatprep.subr.bf16.mxu0 0
        %409 = vmatpush1.bf16.msra.mxu0 0
        %410 = vmatprep.subr.bf16.mxu0 0
        %411 = vmatpush1.bf16.msra.mxu0 0
        %412 = vmatprep.subr.bf16.mxu0 0
        %413 = vmatpush1.bf16.msra.mxu0 0
        %414 = vmatprep.subr.bf16.mxu0 0
        %415 = vmatpush1.bf16.msra.mxu0 0
        %416 = vmatprep.subr.bf16.mxu0 0
        %417 = vmatpush1.bf16.msra.mxu0 0
        %418 = vmatprep.subr.bf16.mxu0 0
        %419 = vmatpush1.bf16.msra.mxu0 0
        %420 = vmatprep.subr.bf16.mxu0 0
        %421 = vmatpush1.bf16.msra.mxu0 0
        %422 = vmatprep.subr.bf16.mxu0 0
        %423 = vmatpush1.bf16.msra.mxu0 0
        %424 = vmatprep.subr.bf16.mxu0 0
        %425 = vmatpush1.bf16.msra.mxu0 0
        %426 = vmatprep.subr.bf16.mxu0 0
        %427 = vmatpush1.bf16.msra.mxu0 0
        %428 = vmatprep.subr.bf16.mxu0 0
        %429 = vmatpush1.bf16.msra.mxu0 0
        %430 = vmatprep.subr.bf16.mxu0 0
        %431 = vmatpush1.bf16.msra.mxu0 0
        %432 = vmatprep.mubr.bf16.mxu0 0
        %433 = vmatmul.mubr.bf16.gmra.mrb[0].mxu0 %v391
        %v434 = vpop.f32.mrb[0].mxu0
        %v435 = vadd.f32 0.0, %v434
        %v436 = vpop.f32.mrb[0].mxu0
        %v437 = vpop.f32.mrb[0].mxu0
        %v438 = vadd.f32 0.0, %v437
        %v439 = vpop.f32.mrb[0].mxu0
        %440 = vmatprep.mubr.bf16.mxu0 0
        %441 = vmatmul.mubr.bf16.gmra.mrb[0].mxu0 %v394
        %v442 = vpop.f32.mrb[0].mxu0
        %v443 = vadd.f32 0.0, %v442
        %v444 = vpop.f32.mrb[0].mxu0
        %v445 = vpop.f32.mrb[0].mxu0
        %v446 = vadd.f32 0.0, %v445
        %v447 = vpop.f32.mrb[0].mxu0
        %448 = vdwg.mxu0
        %v449 = vld [vmem:[%s3] sm:$0xff]
        %v450 = vld [vmem:[%s3 + $0x8] sm:$0xff]
        %v451 = vld [vmem:[%s3 + $0x10] sm:$0xff]
        %v452 = vld [vmem:[%s3 + $0x18] sm:$0xff]
        %v453 = vpack.c.bf16 %v438, %v435
        %v454 = vpack.c.bf16 %v446, %v443
        %v455 = vpack.c.bf16 %v450, %v449
        %v456 = vpack.c.bf16 %v452, %v451
        %458 = vset.pattern.permute.xlu0 0
        %459 = vperm.xlu0 %458, %v455
        %v460 = vpop.permute.xlu0 %459
        %463 = vset.pattern.permute.xlu0 0
        %464 = vperm.xlu0 %463, %v456
        %v465 = vpop.permute.xlu0 %464
        %v467 = vadd.bf16 %v453, %v460
        %v468 = vadd.bf16 %v454, %v465
        %v469 = vmax.bf16 %v467, 0
        %v470 = vmax.bf16 %v468, 0
        %v471 = vld [vmem:[%s4] sm:$0xf]
        %v472 = vld [vmem:[%s4 + $0x4] sm:$0xf]
        %v473 = vld [vmem:[%s4 + $0x8] sm:$0xf]
        %v474 = vld [vmem:[%s4 + $0xc] sm:$0xf]
        %v479 = vunpack.c.l.b16 %v471
        %v480 = vunpack.c.l.b16 %v472
        %v481 = vunpack.c.l.b16 %v473
        %v482 = vunpack.c.l.b16 %v474
        %v483 = vpack.c.b16 %v480, %v479
        %v484 = vpack.c.b16 %v482, %v481
        %vm485 = vcmask 261120
        %v487 = vsel %vm485, %v483, 0
        %v490 = vsel %vm485, %v484, 0
        %492 = vmatprep.subr.bf16.mxu0 0
        %493 = vmatpush1.bf16.msra.mxu0 %v469
        %494 = vmatprep.subr.bf16.mxu0 0
        %495 = vmatpush1.bf16.msra.mxu0 %v470
        %496 = vmatprep.subr.bf16.mxu0 0
        %497 = vmatpush1.bf16.msra.mxu0 0
        %498 = vmatprep.subr.bf16.mxu0 0
        %499 = vmatpush1.bf16.msra.mxu0 0
        %500 = vmatprep.subr.bf16.mxu0 0
        %501 = vmatpush1.bf16.msra.mxu0 0
        %502 = vmatprep.subr.bf16.mxu0 0
        %503 = vmatpush1.bf16.msra.mxu0 0
        %504 = vmatprep.subr.bf16.mxu0 0
        %505 = vmatpush1.bf16.msra.mxu0 0
        %506 = vmatprep.subr.bf16.mxu0 0
        %507 = vmatpush1.bf16.msra.mxu0 0
        %508 = vmatprep.subr.bf16.mxu0 0
        %509 = vmatpush1.bf16.msra.mxu0 0
        %510 = vmatprep.subr.bf16.mxu0 0
        %511 = vmatpush1.bf16.msra.mxu0 0
        %512 = vmatprep.subr.bf16.mxu0 0
        %513 = vmatpush1.bf16.msra.mxu0 0
        %514 = vmatprep.subr.bf16.mxu0 0
        %515 = vmatpush1.bf16.msra.mxu0 0
        %516 = vmatprep.subr.bf16.mxu0 0
        %517 = vmatpush1.bf16.msra.mxu0 0
        %518 = vmatprep.subr.bf16.mxu0 0
        %519 = vmatpush1.bf16.msra.mxu0 0
        %520 = vmatprep.subr.bf16.mxu0 0
        %521 = vmatpush1.bf16.msra.mxu0 0
        %522 = vmatprep.subr.bf16.mxu0 0
        %523 = vmatpush1.bf16.msra.mxu0 0
        %524 = vmatprep.mubr.bf16.mxu0 0
        %525 = vmatmul.mubr.bf16.gmra.mrb[0].mxu0 %v487
        %v526 = vpop.f32.mrb[0].mxu0
        %v527 = vadd.f32 0.0, %v526
        %v528 = vpop.f32.mrb[0].mxu0
        %v529 = vpop.f32.mrb[0].mxu0
        %v530 = vadd.f32 0.0, %v529
        %v531 = vpop.f32.mrb[0].mxu0
        %532 = vmatprep.mubr.bf16.mxu0 0
        %533 = vmatmul.mubr.bf16.gmra.mrb[0].mxu0 %v490
        %v534 = vpop.f32.mrb[0].mxu0
        %v535 = vadd.f32 0.0, %v534
        %v536 = vpop.f32.mrb[0].mxu0
        %v537 = vpop.f32.mrb[0].mxu0
        %v538 = vadd.f32 0.0, %v537
        %v539 = vpop.f32.mrb[0].mxu0
        %540 = vdwg.mxu0
        %v541 = vld [vmem:[%s5] sm:$0xff]
        %v542 = vld [vmem:[%s5 + $0x8] sm:$0xff]
        %v543 = vld [vmem:[%s5 + $0x10] sm:$0xff]
        %v544 = vld [vmem:[%s5 + $0x18] sm:$0xff]
        %v545 = vpack.c.bf16 %v530, %v527
        %v546 = vpack.c.bf16 %v538, %v535
        %v547 = vpack.c.bf16 %v542, %v541
        %v548 = vpack.c.bf16 %v544, %v543
        %550 = vset.pattern.permute.xlu0 0
        %551 = vperm.xlu0 %550, %v547
        %v552 = vpop.permute.xlu0 %551
        %555 = vset.pattern.permute.xlu0 0
        %556 = vperm.xlu0 %555, %v548
        %v557 = vpop.permute.xlu0 %556
        %v559 = vadd.bf16 %v545, %v552
        %v560 = vadd.bf16 %v546, %v557
        %v561 = vmax.bf16 %v559, 0
        %v562 = vmax.bf16 %v560, 0
        %s563 = scalar_lea.vmem %s4, 16
        %v564 = vld [vmem:[%s563] sm:$0xf]
        %v565 = vld [vmem:[%s563 + $0x4] sm:$0xf]
        %v566 = vld [vmem:[%s563 + $0x8] sm:$0xf]
        %v567 = vld [vmem:[%s563 + $0xc] sm:$0xf]
        %v572 = vunpack.c.l.b16 %v564
        %v573 = vunpack.c.l.b16 %v565
        %v574 = vunpack.c.l.b16 %v566
        %v575 = vunpack.c.l.b16 %v567
        %v576 = vpack.c.b16 %v573, %v572
        %v577 = vpack.c.b16 %v575, %v574
        %v579 = vsel %vm485, %v576, 0
        %v582 = vsel %vm485, %v577, 0
        %584 = vmatprep.subr.bf16.mxu0 0
        %585 = vmatpush1.bf16.msra.mxu0 %v561
        %586 = vmatprep.subr.bf16.mxu0 0
        %587 = vmatpush1.bf16.msra.mxu0 %v562
        %588 = vmatprep.subr.bf16.mxu0 0
        %589 = vmatpush1.bf16.msra.mxu0 0
        %590 = vmatprep.subr.bf16.mxu0 0
        %591 = vmatpush1.bf16.msra.mxu0 0
        %592 = vmatprep.subr.bf16.mxu0 0
        %593 = vmatpush1.bf16.msra.mxu0 0
        %594 = vmatprep.subr.bf16.mxu0 0
        %595 = vmatpush1.bf16.msra.mxu0 0
        %596 = vmatprep.subr.bf16.mxu0 0
        %597 = vmatpush1.bf16.msra.mxu0 0
        %598 = vmatprep.subr.bf16.mxu0 0
        %599 = vmatpush1.bf16.msra.mxu0 0
        %600 = vmatprep.subr.bf16.mxu0 0
        %601 = vmatpush1.bf16.msra.mxu0 0
        %602 = vmatprep.subr.bf16.mxu0 0
        %603 = vmatpush1.bf16.msra.mxu0 0
        %604 = vmatprep.subr.bf16.mxu0 0
        %605 = vmatpush1.bf16.msra.mxu0 0
        %606 = vmatprep.subr.bf16.mxu0 0
        %607 = vmatpush1.bf16.msra.mxu0 0
        %608 = vmatprep.subr.bf16.mxu0 0
        %609 = vmatpush1.bf16.msra.mxu0 0
        %610 = vmatprep.subr.bf16.mxu0 0
        %611 = vmatpush1.bf16.msra.mxu0 0
        %612 = vmatprep.subr.bf16.mxu0 0
        %613 = vmatpush1.bf16.msra.mxu0 0
        %614 = vmatprep.subr.bf16.mxu0 0
        %615 = vmatpush1.bf16.msra.mxu0 0
        %616 = vmatprep.mubr.bf16.mxu0 0
        %617 = vmatmul.mubr.bf16.gmra.mrb[0].mxu0 %v579
        %v618 = vpop.f32.mrb[0].mxu0
        %v619 = vadd.f32 0.0, %v618
        %v620 = vpop.f32.mrb[0].mxu0
        %v621 = vpop.f32.mrb[0].mxu0
        %v622 = vadd.f32 0.0, %v621
        %v623 = vpop.f32.mrb[0].mxu0
        %624 = vmatprep.mubr.bf16.mxu0 0
        %625 = vmatmul.mubr.bf16.gmra.mrb[0].mxu0 %v582
        %v626 = vpop.f32.mrb[0].mxu0
        %v627 = vadd.f32 0.0, %v626
        %v628 = vpop.f32.mrb[0].mxu0
        %v629 = vpop.f32.mrb[0].mxu0
        %v630 = vadd.f32 0.0, %v629
        %v631 = vpop.f32.mrb[0].mxu0
        %632 = vdwg.mxu0
        %s633 = scalar_lea.vmem %s5, 32
        %v634 = vld [vmem:[%s633] sm:$0xff]
        %v635 = vld [vmem:[%s633 + $0x8] sm:$0xff]
        %v636 = vld [vmem:[%s633 + $0x10] sm:$0xff]
        %v637 = vld [vmem:[%s633 + $0x18] sm:$0xff]
        %v638 = vpack.c.bf16 %v622, %v619
        %v639 = vpack.c.bf16 %v630, %v627
        %v640 = vpack.c.bf16 %v635, %v634
        %v641 = vpack.c.bf16 %v637, %v636
        %643 = vset.pattern.permute.xlu0 0
        %644 = vperm.xlu0 %643, %v640
        %v645 = vpop.permute.xlu0 %644
        %648 = vset.pattern.permute.xlu0 0
        %649 = vperm.xlu0 %648, %v641
        %v650 = vpop.permute.xlu0 %649
        %v652 = vadd.bf16 %v638, %v645
        %v653 = vadd.bf16 %v639, %v650
        %v654 = vmax.bf16 %v652, 0
        %v655 = vmax.bf16 %v653, 0
        %s656 = scalar_lea.vmem %s4, 32
        %v657 = vld [vmem:[%s656] sm:$0xf]
        %v658 = vld [vmem:[%s656 + $0x4] sm:$0xf]
        %v659 = vld [vmem:[%s656 + $0x8] sm:$0xf]
        %v660 = vld [vmem:[%s656 + $0xc] sm:$0xf]
        %v665 = vunpack.c.l.b16 %v657
        %v666 = vunpack.c.l.b16 %v658
        %v667 = vunpack.c.l.b16 %v659
        %v668 = vunpack.c.l.b16 %v660
        %v669 = vpack.c.b16 %v666, %v665
        %v670 = vpack.c.b16 %v668, %v667
        %v672 = vsel %vm485, %v669, 0
        %v675 = vsel %vm485, %v670, 0
        %677 = vmatprep.subr.bf16.mxu0 0
        %678 = vmatpush1.bf16.msra.mxu0 %v654
        %679 = vmatprep.subr.bf16.mxu0 0
        %680 = vmatpush1.bf16.msra.mxu0 %v655
        %681 = vmatprep.subr.bf16.mxu0 0
        %682 = vmatpush1.bf16.msra.mxu0 0
        %683 = vmatprep.subr.bf16.mxu0 0
        %684 = vmatpush1.bf16.msra.mxu0 0
        %685 = vmatprep.subr.bf16.mxu0 0
        %686 = vmatpush1.bf16.msra.mxu0 0
        %687 = vmatprep.subr.bf16.mxu0 0
        %688 = vmatpush1.bf16.msra.mxu0 0
        %689 = vmatprep.subr.bf16.mxu0 0
        %690 = vmatpush1.bf16.msra.mxu0 0
        %691 = vmatprep.subr.bf16.mxu0 0
        %692 = vmatpush1.bf16.msra.mxu0 0
        %693 = vmatprep.subr.bf16.mxu0 0
        %694 = vmatpush1.bf16.msra.mxu0 0
        %695 = vmatprep.subr.bf16.mxu0 0
        %696 = vmatpush1.bf16.msra.mxu0 0
        %697 = vmatprep.subr.bf16.mxu0 0
        %698 = vmatpush1.bf16.msra.mxu0 0
        %699 = vmatprep.subr.bf16.mxu0 0
        %700 = vmatpush1.bf16.msra.mxu0 0
        %701 = vmatprep.subr.bf16.mxu0 0
        %702 = vmatpush1.bf16.msra.mxu0 0
        %703 = vmatprep.subr.bf16.mxu0 0
        %704 = vmatpush1.bf16.msra.mxu0 0
        %705 = vmatprep.subr.bf16.mxu0 0
        %706 = vmatpush1.bf16.msra.mxu0 0
        %707 = vmatprep.subr.bf16.mxu0 0
        %708 = vmatpush1.bf16.msra.mxu0 0
        %709 = vmatprep.mubr.bf16.mxu0 0
        %710 = vmatmul.mubr.bf16.gmra.mrb[0].mxu0 %v672
        %v711 = vpop.f32.mrb[0].mxu0
        %v712 = vadd.f32 0.0, %v711
        %v713 = vpop.f32.mrb[0].mxu0
        %v714 = vpop.f32.mrb[0].mxu0
        %v715 = vadd.f32 0.0, %v714
        %v716 = vpop.f32.mrb[0].mxu0
        %717 = vmatprep.mubr.bf16.mxu0 0
        %718 = vmatmul.mubr.bf16.gmra.mrb[0].mxu0 %v675
        %v719 = vpop.f32.mrb[0].mxu0
        %v720 = vadd.f32 0.0, %v719
        %v721 = vpop.f32.mrb[0].mxu0
        %v722 = vpop.f32.mrb[0].mxu0
        %v723 = vadd.f32 0.0, %v722
        %v724 = vpop.f32.mrb[0].mxu0
        %725 = vdwg.mxu0
        %s726 = scalar_lea.vmem %s5, 64
        %v727 = vld [vmem:[%s726] sm:$0xff]
        %v728 = vld [vmem:[%s726 + $0x8] sm:$0xff]
        %v729 = vld [vmem:[%s726 + $0x10] sm:$0xff]
        %v730 = vld [vmem:[%s726 + $0x18] sm:$0xff]
        %v731 = vpack.c.bf16 %v715, %v712
        %v732 = vpack.c.bf16 %v723, %v720
        %v733 = vpack.c.bf16 %v728, %v727
        %v734 = vpack.c.bf16 %v730, %v729
        %736 = vset.pattern.permute.xlu0 0
        %737 = vperm.xlu0 %736, %v733
        %v738 = vpop.permute.xlu0 %737
        %741 = vset.pattern.permute.xlu0 0
        %742 = vperm.xlu0 %741, %v734
        %v743 = vpop.permute.xlu0 %742
        %v745 = vadd.bf16 %v731, %v738
        %v746 = vadd.bf16 %v732, %v743
        %v747 = vmax.bf16 %v745, 0
        %v748 = vmax.bf16 %v746, 0
        %v749 = vld [vmem:[%s6] sm:$0xf]
        %v750 = vld [vmem:[%s7] sm:$0xff]
        %752 = vset.pattern.permute.xlu0 0
        %753 = vperm.xlu0 %752, %v750
        %v754 = vpop.permute.xlu0 %753
        %v757 = vsel %vm485, %v749, 0
        %759 = vmatprep.subr.bf16.mxu0 0
        %760 = vmatpush1.bf16.msra.mxu0 %v747
        %761 = vmatprep.subr.bf16.mxu0 0
        %762 = vmatpush1.bf16.msra.mxu0 %v748
        %763 = vmatprep.subr.bf16.mxu0 0
        %764 = vmatpush1.bf16.msra.mxu0 0
        %765 = vmatprep.subr.bf16.mxu0 0
        %766 = vmatpush1.bf16.msra.mxu0 0
        %767 = vmatprep.subr.bf16.mxu0 0
        %768 = vmatpush1.bf16.msra.mxu0 0
        %769 = vmatprep.subr.bf16.mxu0 0
        %770 = vmatpush1.bf16.msra.mxu0 0
        %771 = vmatprep.subr.bf16.mxu0 0
        %772 = vmatpush1.bf16.msra.mxu0 0
        %773 = vmatprep.subr.bf16.mxu0 0
        %774 = vmatpush1.bf16.msra.mxu0 0
        %775 = vmatprep.subr.bf16.mxu0 0
        %776 = vmatpush1.bf16.msra.mxu0 0
        %777 = vmatprep.subr.bf16.mxu0 0
        %778 = vmatpush1.bf16.msra.mxu0 0
        %779 = vmatprep.subr.bf16.mxu0 0
        %780 = vmatpush1.bf16.msra.mxu0 0
        %781 = vmatprep.subr.bf16.mxu0 0
        %782 = vmatpush1.bf16.msra.mxu0 0
        %783 = vmatprep.subr.bf16.mxu0 0
        %784 = vmatpush1.bf16.msra.mxu0 0
        %785 = vmatprep.subr.bf16.mxu0 0
        %786 = vmatpush1.bf16.msra.mxu0 0
        %787 = vmatprep.subr.bf16.mxu0 0
        %788 = vmatpush1.bf16.msra.mxu0 0
        %789 = vmatprep.subr.bf16.mxu0 0
        %790 = vmatpush1.bf16.msra.mxu0 0
        %791 = vmatprep.mubr.bf16.mxu0 0
        %792 = vmatmul.mubr.bf16.gmra.mrb[0].mxu0 %v757
        %v793 = vpop.f32.mrb[0].mxu0
        %v794 = vadd.f32 %v754, %v793
        %v795 = vpop.f32.mrb[0].mxu0
        %v796 = vpop.f32.mrb[0].mxu0
        %v797 = vpop.f32.mrb[0].mxu0
        %798 = vdwg.mxu0
        %v799 = vadd.f32 %v372, %v794
        %s800 = scalar_lea.vmem %s2, 16
        %v801 = vld [vmem:[%s800] sm:$0xf]
        %v802 = vld [vmem:[%s800 + $0x4] sm:$0xf]
        %v803 = vld [vmem:[%s800 + $0x8] sm:$0xf]
        %v804 = vld [vmem:[%s800 + $0xc] sm:$0xf]
        %v805 = vpack.c.bf16 %v799, %v799
        %v810 = vunpack.c.l.b16 %v801
        %v811 = vunpack.c.l.b16 %v802
        %v812 = vunpack.c.l.b16 %v803
        %v813 = vunpack.c.l.b16 %v804
        %v814 = vpack.c.b16 %v811, %v810
        %v815 = vpack.c.b16 %v813, %v812
        %v817 = vsel %vm389, %v814, 0
        %v820 = vsel %vm389, %v815, 0
        %v823 = vsel %vm396, %v805, 0
        %825 = vmatprep.subr.bf16.mxu0 0
        %826 = vmatpush1.bf16.msra.mxu0 %v823
        %827 = vmatprep.subr.bf16.mxu0 0
        %828 = vmatpush1.bf16.msra.mxu0 0
        %829 = vmatprep.subr.bf16.mxu0 0
        %830 = vmatpush1.bf16.msra.mxu0 0
        %831 = vmatprep.subr.bf16.mxu0 0
        %832 = vmatpush1.bf16.msra.mxu0 0
        %833 = vmatprep.subr.bf16.mxu0 0
        %834 = vmatpush1.bf16.msra.mxu0 0
        %835 = vmatprep.subr.bf16.mxu0 0
        %836 = vmatpush1.bf16.msra.mxu0 0
        %837 = vmatprep.subr.bf16.mxu0 0
        %838 = vmatpush1.bf16.msra.mxu0 0
        %839 = vmatprep.subr.bf16.mxu0 0
        %840 = vmatpush1.bf16.msra.mxu0 0
        %841 = vmatprep.subr.bf16.mxu0 0
        %842 = vmatpush1.bf16.msra.mxu0 0
        %843 = vmatprep.subr.bf16.mxu0 0
        %844 = vmatpush1.bf16.msra.mxu0 0
        %845 = vmatprep.subr.bf16.mxu0 0
        %846 = vmatpush1.bf16.msra.mxu0 0
        %847 = vmatprep.subr.bf16.mxu0 0
        %848 = vmatpush1.bf16.msra.mxu0 0
        %849 = vmatprep.subr.bf16.mxu0 0
        %850 = vmatpush1.bf16.msra.mxu0 0
        %851 = vmatprep.subr.bf16.mxu0 0
        %852 = vmatpush1.bf16.msra.mxu0 0
        %853 = vmatprep.subr.bf16.mxu0 0
        %854 = vmatpush1.bf16.msra.mxu0 0
        %855 = vmatprep.subr.bf16.mxu0 0
        %856 = vmatpush1.bf16.msra.mxu0 0
        %857 = vmatprep.mubr.bf16.mxu0 0
        %858 = vmatmul.mubr.bf16.gmra.mrb[0].mxu0 %v817
        %v859 = vpop.f32.mrb[0].mxu0
        %v860 = vadd.f32 0.0, %v859
        %v861 = vpop.f32.mrb[0].mxu0
        %v862 = vpop.f32.mrb[0].mxu0
        %v863 = vadd.f32 0.0, %v862
        %v864 = vpop.f32.mrb[0].mxu0
        %865 = vmatprep.mubr.bf16.mxu0 0
        %866 = vmatmul.mubr.bf16.gmra.mrb[0].mxu0 %v820
        %v867 = vpop.f32.mrb[0].mxu0
        %v868 = vadd.f32 0.0, %v867
        %v869 = vpop.f32.mrb[0].mxu0
        %v870 = vpop.f32.mrb[0].mxu0
        %v871 = vadd.f32 0.0, %v870
        %v872 = vpop.f32.mrb[0].mxu0
        %873 = vdwg.mxu0
        %s874 = scalar_lea.vmem %s3, 32
        %v875 = vld [vmem:[%s874] sm:$0xff]
        %v876 = vld [vmem:[%s874 + $0x8] sm:$0xff]
        %v877 = vld [vmem:[%s874 + $0x10] sm:$0xff]
        %v878 = vld [vmem:[%s874 + $0x18] sm:$0xff]
        %v879 = vpack.c.bf16 %v863, %v860
        %v880 = vpack.c.bf16 %v871, %v868
        %v881 = vpack.c.bf16 %v876, %v875
        %v882 = vpack.c.bf16 %v878, %v877
        %884 = vset.pattern.permute.xlu0 0
        %885 = vperm.xlu0 %884, %v881
        %v886 = vpop.permute.xlu0 %885
        %889 = vset.pattern.permute.xlu0 0
        %890 = vperm.xlu0 %889, %v882
        %v891 = vpop.permute.xlu0 %890
        %v893 = vadd.bf16 %v879, %v886
        %v894 = vadd.bf16 %v880, %v891
        %v895 = vmax.bf16 %v893, 0
        %v896 = vmax.bf16 %v894, 0
        %s897 = scalar_lea.vmem %s4, 48
        %v898 = vld [vmem:[%s897] sm:$0xf]
        %v899 = vld [vmem:[%s897 + $0x4] sm:$0xf]
        %v900 = vld [vmem:[%s897 + $0x8] sm:$0xf]
        %v901 = vld [vmem:[%s897 + $0xc] sm:$0xf]
        %v906 = vunpack.c.l.b16 %v898
        %v907 = vunpack.c.l.b16 %v899
        %v908 = vunpack.c.l.b16 %v900
        %v909 = vunpack.c.l.b16 %v901
        %v910 = vpack.c.b16 %v907, %v906
        %v911 = vpack.c.b16 %v909, %v908
        %v913 = vsel %vm485, %v910, 0
        %v916 = vsel %vm485, %v911, 0
        %918 = vmatprep.subr.bf16.mxu0 0
        %919 = vmatpush1.bf16.msra.mxu0 %v895
        %920 = vmatprep.subr.bf16.mxu0 0
        %921 = vmatpush1.bf16.msra.mxu0 %v896
        %922 = vmatprep.subr.bf16.mxu0 0
        %923 = vmatpush1.bf16.msra.mxu0 0
        %924 = vmatprep.subr.bf16.mxu0 0
        %925 = vmatpush1.bf16.msra.mxu0 0
        %926 = vmatprep.subr.bf16.mxu0 0
        %927 = vmatpush1.bf16.msra.mxu0 0
        %928 = vmatprep.subr.bf16.mxu0 0
        %929 = vmatpush1.bf16.msra.mxu0 0
        %930 = vmatprep.subr.bf16.mxu0 0
        %931 = vmatpush1.bf16.msra.mxu0 0
        %932 = vmatprep.subr.bf16.mxu0 0
        %933 = vmatpush1.bf16.msra.mxu0 0
        %934 = vmatprep.subr.bf16.mxu0 0
        %935 = vmatpush1.bf16.msra.mxu0 0
        %936 = vmatprep.subr.bf16.mxu0 0
        %937 = vmatpush1.bf16.msra.mxu0 0
        %938 = vmatprep.subr.bf16.mxu0 0
        %939 = vmatpush1.bf16.msra.mxu0 0
        %940 = vmatprep.subr.bf16.mxu0 0
        %941 = vmatpush1.bf16.msra.mxu0 0
        %942 = vmatprep.subr.bf16.mxu0 0
        %943 = vmatpush1.bf16.msra.mxu0 0
        %944 = vmatprep.subr.bf16.mxu0 0
        %945 = vmatpush1.bf16.msra.mxu0 0
        %946 = vmatprep.subr.bf16.mxu0 0
        %947 = vmatpush1.bf16.msra.mxu0 0
        %948 = vmatprep.subr.bf16.mxu0 0
        %949 = vmatpush1.bf16.msra.mxu0 0
        %950 = vmatprep.mubr.bf16.mxu0 0
        %951 = vmatmul.mubr.bf16.gmra.mrb[0].mxu0 %v913
        %v952 = vpop.f32.mrb[0].mxu0
        %v953 = vadd.f32 0.0, %v952
        %v954 = vpop.f32.mrb[0].mxu0
        %v955 = vpop.f32.mrb[0].mxu0
        %v956 = vadd.f32 0.0, %v955
        %v957 = vpop.f32.mrb[0].mxu0
        %958 = vmatprep.mubr.bf16.mxu0 0
        %959 = vmatmul.mubr.bf16.gmra.mrb[0].mxu0 %v916
        %v960 = vpop.f32.mrb[0].mxu0
        %v961 = vadd.f32 0.0, %v960
        %v962 = vpop.f32.mrb[0].mxu0
        %v963 = vpop.f32.mrb[0].mxu0
        %v964 = vadd.f32 0.0, %v963
        %v965 = vpop.f32.mrb[0].mxu0
        %966 = vdwg.mxu0
        %s967 = scalar_lea.vmem %s5, 96
        %v968 = vld [vmem:[%s967] sm:$0xff]
        %v969 = vld [vmem:[%s967 + $0x8] sm:$0xff]
        %v970 = vld [vmem:[%s967 + $0x10] sm:$0xff]
        %v971 = vld [vmem:[%s967 + $0x18] sm:$0xff]
        %v972 = vpack.c.bf16 %v956, %v953
        %v973 = vpack.c.bf16 %v964, %v961
        %v974 = vpack.c.bf16 %v969, %v968
        %v975 = vpack.c.bf16 %v971, %v970
        %977 = vset.pattern.permute.xlu0 0
        %978 = vperm.xlu0 %977, %v974
        %v979 = vpop.permute.xlu0 %978
        %982 = vset.pattern.permute.xlu0 0
        %983 = vperm.xlu0 %982, %v975
        %v984 = vpop.permute.xlu0 %983
        %v986 = vadd.bf16 %v972, %v979
        %v987 = vadd.bf16 %v973, %v984
        %v988 = vmax.bf16 %v986, 0
        %v989 = vmax.bf16 %v987, 0
        %s990 = scalar_lea.vmem %s4, 64
        %v991 = vld [vmem:[%s990] sm:$0xf]
        %v992 = vld [vmem:[%s990 + $0x4] sm:$0xf]
        %v993 = vld [vmem:[%s990 + $0x8] sm:$0xf]
        %v994 = vld [vmem:[%s990 + $0xc] sm:$0xf]
        %v999 = vunpack.c.l.b16 %v991
        %v1000 = vunpack.c.l.b16 %v992
        %v1001 = vunpack.c.l.b16 %v993
        %v1002 = vunpack.c.l.b16 %v994
        %v1003 = vpack.c.b16 %v1000, %v999
        %v1004 = vpack.c.b16 %v1002, %v1001
        %v1006 = vsel %vm485, %v1003, 0
        %v1009 = vsel %vm485, %v1004, 0
        %1011 = vmatprep.subr.bf16.mxu0 0
        %1012 = vmatpush1.bf16.msra.mxu0 %v988
        %1013 = vmatprep.subr.bf16.mxu0 0
        %1014 = vmatpush1.bf16.msra.mxu0 %v989
        %1015 = vmatprep.subr.bf16.mxu0 0
        %1016 = vmatpush1.bf16.msra.mxu0 0
        %1017 = vmatprep.subr.bf16.mxu0 0
        %1018 = vmatpush1.bf16.msra.mxu0 0
        %1019 = vmatprep.subr.bf16.mxu0 0
        %1020 = vmatpush1.bf16.msra.mxu0 0
        %1021 = vmatprep.subr.bf16.mxu0 0
        %1022 = vmatpush1.bf16.msra.mxu0 0
        %1023 = vmatprep.subr.bf16.mxu0 0
        %1024 = vmatpush1.bf16.msra.mxu0 0
        %1025 = vmatprep.subr.bf16.mxu0 0
        %1026 = vmatpush1.bf16.msra.mxu0 0
        %1027 = vmatprep.subr.bf16.mxu0 0
        %1028 = vmatpush1.bf16.msra.mxu0 0
        %1029 = vmatprep.subr.bf16.mxu0 0
        %1030 = vmatpush1.bf16.msra.mxu0 0
        %1031 = vmatprep.subr.bf16.mxu0 0
        %1032 = vmatpush1.bf16.msra.mxu0 0
        %1033 = vmatprep.subr.bf16.mxu0 0
        %1034 = vmatpush1.bf16.msra.mxu0 0
        %1035 = vmatprep.subr.bf16.mxu0 0
        %1036 = vmatpush1.bf16.msra.mxu0 0
        %1037 = vmatprep.subr.bf16.mxu0 0
        %1038 = vmatpush1.bf16.msra.mxu0 0
        %1039 = vmatprep.subr.bf16.mxu0 0
        %1040 = vmatpush1.bf16.msra.mxu0 0
        %1041 = vmatprep.subr.bf16.mxu0 0
        %1042 = vmatpush1.bf16.msra.mxu0 0
        %1043 = vmatprep.mubr.bf16.mxu0 0
        %1044 = vmatmul.mubr.bf16.gmra.mrb[0].mxu0 %v1006
        %v1045 = vpop.f32.mrb[0].mxu0
        %v1046 = vadd.f32 0.0, %v1045
        %v1047 = vpop.f32.mrb[0].mxu0
        %v1048 = vpop.f32.mrb[0].mxu0
        %v1049 = vadd.f32 0.0, %v1048
        %v1050 = vpop.f32.mrb[0].mxu0
        %1051 = vmatprep.mubr.bf16.mxu0 0
        %1052 = vmatmul.mubr.bf16.gmra.mrb[0].mxu0 %v1009
        %v1053 = vpop.f32.mrb[0].mxu0
        %v1054 = vadd.f32 0.0, %v1053
        %v1055 = vpop.f32.mrb[0].mxu0
        %v1056 = vpop.f32.mrb[0].mxu0
        %v1057 = vadd.f32 0.0, %v1056
        %v1058 = vpop.f32.mrb[0].mxu0
        %1059 = vdwg.mxu0
        %s1060 = scalar_lea.vmem %s5, 128
        %v1061 = vld [vmem:[%s1060] sm:$0xff]
        %v1062 = vld [vmem:[%s1060 + $0x8] sm:$0xff]
        %v1063 = vld [vmem:[%s1060 + $0x10] sm:$0xff]
        %v1064 = vld [vmem:[%s1060 + $0x18] sm:$0xff]
        %v1065 = vpack.c.bf16 %v1049, %v1046
        %v1066 = vpack.c.bf16 %v1057, %v1054
        %v1067 = vpack.c.bf16 %v1062, %v1061
        %v1068 = vpack.c.bf16 %v1064, %v1063
        %1070 = vset.pattern.permute.xlu0 0
        %1071 = vperm.xlu0 %1070, %v1067
        %v1072 = vpop.permute.xlu0 %1071
        %1075 = vset.pattern.permute.xlu0 0
        %1076 = vperm.xlu0 %1075, %v1068
        %v1077 = vpop.permute.xlu0 %1076
        %v1079 = vadd.bf16 %v1065, %v1072
        %v1080 = vadd.bf16 %v1066, %v1077
        %v1081 = vmax.bf16 %v1079, 0
        %v1082 = vmax.bf16 %v1080, 0
        %s1083 = scalar_lea.vmem %s4, 80
        %v1084 = vld [vmem:[%s1083] sm:$0xf]
        %v1085 = vld [vmem:[%s1083 + $0x4] sm:$0xf]
        %v1086 = vld [vmem:[%s1083 + $0x8] sm:$0xf]
        %v1087 = vld [vmem:[%s1083 + $0xc] sm:$0xf]
        %v1092 = vunpack.c.l.b16 %v1084
        %v1093 = vunpack.c.l.b16 %v1085
        %v1094 = vunpack.c.l.b16 %v1086
        %v1095 = vunpack.c.l.b16 %v1087
        %v1096 = vpack.c.b16 %v1093, %v1092
        %v1097 = vpack.c.b16 %v1095, %v1094
        %v1099 = vsel %vm485, %v1096, 0
        %v1102 = vsel %vm485, %v1097, 0
        %1104 = vmatprep.subr.bf16.mxu0 0
        %1105 = vmatpush1.bf16.msra.mxu0 %v1081
        %1106 = vmatprep.subr.bf16.mxu0 0
        %1107 = vmatpush1.bf16.msra.mxu0 %v1082
        %1108 = vmatprep.subr.bf16.mxu0 0
        %1109 = vmatpush1.bf16.msra.mxu0 0
        %1110 = vmatprep.subr.bf16.mxu0 0
        %1111 = vmatpush1.bf16.msra.mxu0 0
        %1112 = vmatprep.subr.bf16.mxu0 0
        %1113 = vmatpush1.bf16.msra.mxu0 0
        %1114 = vmatprep.subr.bf16.mxu0 0
        %1115 = vmatpush1.bf16.msra.mxu0 0
        %1116 = vmatprep.subr.bf16.mxu0 0
        %1117 = vmatpush1.bf16.msra.mxu0 0
        %1118 = vmatprep.subr.bf16.mxu0 0
        %1119 = vmatpush1.bf16.msra.mxu0 0
        %1120 = vmatprep.subr.bf16.mxu0 0
        %1121 = vmatpush1.bf16.msra.mxu0 0
        %1122 = vmatprep.subr.bf16.mxu0 0
        %1123 = vmatpush1.bf16.msra.mxu0 0
        %1124 = vmatprep.subr.bf16.mxu0 0
        %1125 = vmatpush1.bf16.msra.mxu0 0
        %1126 = vmatprep.subr.bf16.mxu0 0
        %1127 = vmatpush1.bf16.msra.mxu0 0
        %1128 = vmatprep.subr.bf16.mxu0 0
        %1129 = vmatpush1.bf16.msra.mxu0 0
        %1130 = vmatprep.subr.bf16.mxu0 0
        %1131 = vmatpush1.bf16.msra.mxu0 0
        %1132 = vmatprep.subr.bf16.mxu0 0
        %1133 = vmatpush1.bf16.msra.mxu0 0
        %1134 = vmatprep.subr.bf16.mxu0 0
        %1135 = vmatpush1.bf16.msra.mxu0 0
        %1136 = vmatprep.mubr.bf16.mxu0 0
        %1137 = vmatmul.mubr.bf16.gmra.mrb[0].mxu0 %v1099
        %v1138 = vpop.f32.mrb[0].mxu0
        %v1139 = vadd.f32 0.0, %v1138
        %v1140 = vpop.f32.mrb[0].mxu0
        %v1141 = vpop.f32.mrb[0].mxu0
        %v1142 = vadd.f32 0.0, %v1141
        %v1143 = vpop.f32.mrb[0].mxu0
        %1144 = vmatprep.mubr.bf16.mxu0 0
        %1145 = vmatmul.mubr.bf16.gmra.mrb[0].mxu0 %v1102
        %v1146 = vpop.f32.mrb[0].mxu0
        %v1147 = vadd.f32 0.0, %v1146
        %v1148 = vpop.f32.mrb[0].mxu0
        %v1149 = vpop.f32.mrb[0].mxu0
        %v1150 = vadd.f32 0.0, %v1149
        %v1151 = vpop.f32.mrb[0].mxu0
        %1152 = vdwg.mxu0
        %s1153 = scalar_lea.vmem %s5, 160
        %v1154 = vld [vmem:[%s1153] sm:$0xff]
        %v1155 = vld [vmem:[%s1153 + $0x8] sm:$0xff]
        %v1156 = vld [vmem:[%s1153 + $0x10] sm:$0xff]
        %v1157 = vld [vmem:[%s1153 + $0x18] sm:$0xff]
        %v1158 = vpack.c.bf16 %v1142, %v1139
        %v1159 = vpack.c.bf16 %v1150, %v1147
        %v1160 = vpack.c.bf16 %v1155, %v1154
        %v1161 = vpack.c.bf16 %v1157, %v1156
        %1163 = vset.pattern.permute.xlu0 0
        %1164 = vperm.xlu0 %1163, %v1160
        %v1165 = vpop.permute.xlu0 %1164
        %1168 = vset.pattern.permute.xlu0 0
        %1169 = vperm.xlu0 %1168, %v1161
        %v1170 = vpop.permute.xlu0 %1169
        %v1172 = vadd.bf16 %v1158, %v1165
        %v1173 = vadd.bf16 %v1159, %v1170
        %v1174 = vmax.bf16 %v1172, 0
        %v1175 = vmax.bf16 %v1173, 0
        %s1176 = scalar_lea.vmem %s6, 4
        %v1177 = vld [vmem:[%s1176] sm:$0xf]
        %s1178 = scalar_lea.vmem %s7, 8
        %v1179 = vld [vmem:[%s1178] sm:$0xff]
        %1181 = vset.pattern.permute.xlu0 0
        %1182 = vperm.xlu0 %1181, %v1179
        %v1183 = vpop.permute.xlu0 %1182
        %v1186 = vsel %vm485, %v1177, 0
        %1188 = vmatprep.subr.bf16.mxu0 0
        %1189 = vmatpush1.bf16.msra.mxu0 %v1174
        %1190 = vmatprep.subr.bf16.mxu0 0
        %1191 = vmatpush1.bf16.msra.mxu0 %v1175
        %1192 = vmatprep.subr.bf16.mxu0 0
        %1193 = vmatpush1.bf16.msra.mxu0 0
        %1194 = vmatprep.subr.bf16.mxu0 0
        %1195 = vmatpush1.bf16.msra.mxu0 0
        %1196 = vmatprep.subr.bf16.mxu0 0
        %1197 = vmatpush1.bf16.msra.mxu0 0
        %1198 = vmatprep.subr.bf16.mxu0 0
        %1199 = vmatpush1.bf16.msra.mxu0 0
        %1200 = vmatprep.subr.bf16.mxu0 0
        %1201 = vmatpush1.bf16.msra.mxu0 0
        %1202 = vmatprep.subr.bf16.mxu0 0
        %1203 = vmatpush1.bf16.msra.mxu0 0
        %1204 = vmatprep.subr.bf16.mxu0 0
        %1205 = vmatpush1.bf16.msra.mxu0 0
        %1206 = vmatprep.subr.bf16.mxu0 0
        %1207 = vmatpush1.bf16.msra.mxu0 0
        %1208 = vmatprep.subr.bf16.mxu0 0
        %1209 = vmatpush1.bf16.msra.mxu0 0
        %1210 = vmatprep.subr.bf16.mxu0 0
        %1211 = vmatpush1.bf16.msra.mxu0 0
        %1212 = vmatprep.subr.bf16.mxu0 0
        %1213 = vmatpush1.bf16.msra.mxu0 0
        %1214 = vmatprep.subr.bf16.mxu0 0
        %1215 = vmatpush1.bf16.msra.mxu0 0
        %1216 = vmatprep.subr.bf16.mxu0 0
        %1217 = vmatpush1.bf16.msra.mxu0 0
        %1218 = vmatprep.subr.bf16.mxu0 0
        %1219 = vmatpush1.bf16.msra.mxu0 0
        %1220 = vmatprep.mubr.bf16.mxu0 0
        %1221 = vmatmul.mubr.bf16.gmra.mrb[0].mxu0 %v1186
        %v1222 = vpop.f32.mrb[0].mxu0
        %v1223 = vadd.f32 %v1183, %v1222
        %v1224 = vpop.f32.mrb[0].mxu0
        %v1225 = vpop.f32.mrb[0].mxu0
        %v1226 = vpop.f32.mrb[0].mxu0
        %1227 = vdwg.mxu0
        %v1228 = vadd.f32 %v373, %v1223
        %s1229 = scalar_lea.vmem %s2, 32
        %v1230 = vld [vmem:[%s1229] sm:$0xf]
        %v1231 = vld [vmem:[%s1229 + $0x4] sm:$0xf]
        %v1232 = vld [vmem:[%s1229 + $0x8] sm:$0xf]
        %v1233 = vld [vmem:[%s1229 + $0xc] sm:$0xf]
        %v1234 = vpack.c.bf16 %v1228, %v1228
        %v1239 = vunpack.c.l.b16 %v1230
        %v1240 = vunpack.c.l.b16 %v1231
        %v1241 = vunpack.c.l.b16 %v1232
        %v1242 = vunpack.c.l.b16 %v1233
        %v1243 = vpack.c.b16 %v1240, %v1239
        %v1244 = vpack.c.b16 %v1242, %v1241
        %v1246 = vsel %vm389, %v1243, 0
        %v1249 = vsel %vm389, %v1244, 0
        %v1252 = vsel %vm396, %v1234, 0
        %1254 = vmatprep.subr.bf16.mxu0 0
        %1255 = vmatpush1.bf16.msra.mxu0 %v1252
        %1256 = vmatprep.subr.bf16.mxu0 0
        %1257 = vmatpush1.bf16.msra.mxu0 0
        %1258 = vmatprep.subr.bf16.mxu0 0
        %1259 = vmatpush1.bf16.msra.mxu0 0
        %1260 = vmatprep.subr.bf16.mxu0 0
        %1261 = vmatpush1.bf16.msra.mxu0 0
        %1262 = vmatprep.subr.bf16.mxu0 0
        %1263 = vmatpush1.bf16.msra.mxu0 0
        %1264 = vmatprep.subr.bf16.mxu0 0
        %1265 = vmatpush1.bf16.msra.mxu0 0
        %1266 = vmatprep.subr.bf16.mxu0 0
        %1267 = vmatpush1.bf16.msra.mxu0 0
        %1268 = vmatprep.subr.bf16.mxu0 0
        %1269 = vmatpush1.bf16.msra.mxu0 0
        %1270 = vmatprep.subr.bf16.mxu0 0
        %1271 = vmatpush1.bf16.msra.mxu0 0
        %1272 = vmatprep.subr.bf16.mxu0 0
        %1273 = vmatpush1.bf16.msra.mxu0 0
        %1274 = vmatprep.subr.bf16.mxu0 0
        %1275 = vmatpush1.bf16.msra.mxu0 0
        %1276 = vmatprep.subr.bf16.mxu0 0
        %1277 = vmatpush1.bf16.msra.mxu0 0
        %1278 = vmatprep.subr.bf16.mxu0 0
        %1279 = vmatpush1.bf16.msra.mxu0 0
        %1280 = vmatprep.subr.bf16.mxu0 0
        %1281 = vmatpush1.bf16.msra.mxu0 0
        %1282 = vmatprep.subr.bf16.mxu0 0
        %1283 = vmatpush1.bf16.msra.mxu0 0
        %1284 = vmatprep.subr.bf16.mxu0 0
        %1285 = vmatpush1.bf16.msra.mxu0 0
        %1286 = vmatprep.mubr.bf16.mxu0 0
        %1287 = vmatmul.mubr.bf16.gmra.mrb[0].mxu0 %v1246
        %v1288 = vpop.f32.mrb[0].mxu0
        %v1289 = vadd.f32 0.0, %v1288
        %v1290 = vpop.f32.mrb[0].mxu0
        %v1291 = vpop.f32.mrb[0].mxu0
        %v1292 = vadd.f32 0.0, %v1291
        %v1293 = vpop.f32.mrb[0].mxu0
        %1294 = vmatprep.mubr.bf16.mxu0 0
        %1295 = vmatmul.mubr.bf16.gmra.mrb[0].mxu0 %v1249
        %v1296 = vpop.f32.mrb[0].mxu0
        %v1297 = vadd.f32 0.0, %v1296
        %v1298 = vpop.f32.mrb[0].mxu0
        %v1299 = vpop.f32.mrb[0].mxu0
        %v1300 = vadd.f32 0.0, %v1299
        %v1301 = vpop.f32.mrb[0].mxu0
        %1302 = vdwg.mxu0
        %s1303 = scalar_lea.vmem %s3, 64
        %v1304 = vld [vmem:[%s1303] sm:$0xff]
        %v1305 = vld [vmem:[%s1303 + $0x8] sm:$0xff]
        %v1306 = vld [vmem:[%s1303 + $0x10] sm:$0xff]
        %v1307 = vld [vmem:[%s1303 + $0x18] sm:$0xff]
        %v1308 = vpack.c.bf16 %v1292, %v1289
        %v1309 = vpack.c.bf16 %v1300, %v1297
        %v1310 = vpack.c.bf16 %v1305, %v1304
        %v1311 = vpack.c.bf16 %v1307, %v1306
        %1313 = vset.pattern.permute.xlu0 0
        %1314 = vperm.xlu0 %1313, %v1310
        %v1315 = vpop.permute.xlu0 %1314
        %1318 = vset.pattern.permute.xlu0 0
        %1319 = vperm.xlu0 %1318, %v1311
        %v1320 = vpop.permute.xlu0 %1319
        %v1322 = vadd.bf16 %v1308, %v1315
        %v1323 = vadd.bf16 %v1309, %v1320
        %v1324 = vmax.bf16 %v1322, 0
        %v1325 = vmax.bf16 %v1323, 0
        %s1326 = scalar_lea.vmem %s4, 96
        %v1327 = vld [vmem:[%s1326] sm:$0xf]
        %v1328 = vld [vmem:[%s1326 + $0x4] sm:$0xf]
        %v1329 = vld [vmem:[%s1326 + $0x8] sm:$0xf]
        %v1330 = vld [vmem:[%s1326 + $0xc] sm:$0xf]
        %v1335 = vunpack.c.l.b16 %v1327
        %v1336 = vunpack.c.l.b16 %v1328
        %v1337 = vunpack.c.l.b16 %v1329
        %v1338 = vunpack.c.l.b16 %v1330
        %v1339 = vpack.c.b16 %v1336, %v1335
        %v1340 = vpack.c.b16 %v1338, %v1337
        %v1342 = vsel %vm485, %v1339, 0
        %v1345 = vsel %vm485, %v1340, 0
        %1347 = vmatprep.subr.bf16.mxu0 0
        %1348 = vmatpush1.bf16.msra.mxu0 %v1324
        %1349 = vmatprep.subr.bf16.mxu0 0
        %1350 = vmatpush1.bf16.msra.mxu0 %v1325
        %1351 = vmatprep.subr.bf16.mxu0 0
        %1352 = vmatpush1.bf16.msra.mxu0 0
        %1353 = vmatprep.subr.bf16.mxu0 0
        %1354 = vmatpush1.bf16.msra.mxu0 0
        %1355 = vmatprep.subr.bf16.mxu0 0
        %1356 = vmatpush1.bf16.msra.mxu0 0
        %1357 = vmatprep.subr.bf16.mxu0 0
        %1358 = vmatpush1.bf16.msra.mxu0 0
        %1359 = vmatprep.subr.bf16.mxu0 0
        %1360 = vmatpush1.bf16.msra.mxu0 0
        %1361 = vmatprep.subr.bf16.mxu0 0
        %1362 = vmatpush1.bf16.msra.mxu0 0
        %1363 = vmatprep.subr.bf16.mxu0 0
        %1364 = vmatpush1.bf16.msra.mxu0 0
        %1365 = vmatprep.subr.bf16.mxu0 0
        %1366 = vmatpush1.bf16.msra.mxu0 0
        %1367 = vmatprep.subr.bf16.mxu0 0
        %1368 = vmatpush1.bf16.msra.mxu0 0
        %1369 = vmatprep.subr.bf16.mxu0 0
        %1370 = vmatpush1.bf16.msra.mxu0 0
        %1371 = vmatprep.subr.bf16.mxu0 0
        %1372 = vmatpush1.bf16.msra.mxu0 0
        %1373 = vmatprep.subr.bf16.mxu0 0
        %1374 = vmatpush1.bf16.msra.mxu0 0
        %1375 = vmatprep.subr.bf16.mxu0 0
        %1376 = vmatpush1.bf16.msra.mxu0 0
        %1377 = vmatprep.subr.bf16.mxu0 0
        %1378 = vmatpush1.bf16.msra.mxu0 0
        %1379 = vmatprep.mubr.bf16.mxu0 0
        %1380 = vmatmul.mubr.bf16.gmra.mrb[0].mxu0 %v1342
        %v1381 = vpop.f32.mrb[0].mxu0
        %v1382 = vadd.f32 0.0, %v1381
        %v1383 = vpop.f32.mrb[0].mxu0
        %v1384 = vpop.f32.mrb[0].mxu0
        %v1385 = vadd.f32 0.0, %v1384
        %v1386 = vpop.f32.mrb[0].mxu0
        %1387 = vmatprep.mubr.bf16.mxu0 0
        %1388 = vmatmul.mubr.bf16.gmra.mrb[0].mxu0 %v1345
        %v1389 = vpop.f32.mrb[0].mxu0
        %v1390 = vadd.f32 0.0, %v1389
        %v1391 = vpop.f32.mrb[0].mxu0
        %v1392 = vpop.f32.mrb[0].mxu0
        %v1393 = vadd.f32 0.0, %v1392
        %v1394 = vpop.f32.mrb[0].mxu0
        %1395 = vdwg.mxu0
        %s1396 = scalar_lea.vmem %s5, 192
        %v1397 = vld [vmem:[%s1396] sm:$0xff]
        %v1398 = vld [vmem:[%s1396 + $0x8] sm:$0xff]
        %v1399 = vld [vmem:[%s1396 + $0x10] sm:$0xff]
        %v1400 = vld [vmem:[%s1396 + $0x18] sm:$0xff]
        %v1401 = vpack.c.bf16 %v1385, %v1382
        %v1402 = vpack.c.bf16 %v1393, %v1390
        %v1403 = vpack.c.bf16 %v1398, %v1397
        %v1404 = vpack.c.bf16 %v1400, %v1399
        %1406 = vset.pattern.permute.xlu0 0
        %1407 = vperm.xlu0 %1406, %v1403
        %v1408 = vpop.permute.xlu0 %1407
        %1411 = vset.pattern.permute.xlu0 0
        %1412 = vperm.xlu0 %1411, %v1404
        %v1413 = vpop.permute.xlu0 %1412
        %v1415 = vadd.bf16 %v1401, %v1408
        %v1416 = vadd.bf16 %v1402, %v1413
        %v1417 = vmax.bf16 %v1415, 0
        %v1418 = vmax.bf16 %v1416, 0
        %s1419 = scalar_lea.vmem %s4, 112
        %v1420 = vld [vmem:[%s1419] sm:$0xf]
        %v1421 = vld [vmem:[%s1419 + $0x4] sm:$0xf]
        %v1422 = vld [vmem:[%s1419 + $0x8] sm:$0xf]
        %v1423 = vld [vmem:[%s1419 + $0xc] sm:$0xf]
        %v1428 = vunpack.c.l.b16 %v1420
        %v1429 = vunpack.c.l.b16 %v1421
        %v1430 = vunpack.c.l.b16 %v1422
        %v1431 = vunpack.c.l.b16 %v1423
        %v1432 = vpack.c.b16 %v1429, %v1428
        %v1433 = vpack.c.b16 %v1431, %v1430
        %v1435 = vsel %vm485, %v1432, 0
        %v1438 = vsel %vm485, %v1433, 0
        %1440 = vmatprep.subr.bf16.mxu0 0
        %1441 = vmatpush1.bf16.msra.mxu0 %v1417
        %1442 = vmatprep.subr.bf16.mxu0 0
        %1443 = vmatpush1.bf16.msra.mxu0 %v1418
        %1444 = vmatprep.subr.bf16.mxu0 0
        %1445 = vmatpush1.bf16.msra.mxu0 0
        %1446 = vmatprep.subr.bf16.mxu0 0
        %1447 = vmatpush1.bf16.msra.mxu0 0
        %1448 = vmatprep.subr.bf16.mxu0 0
        %1449 = vmatpush1.bf16.msra.mxu0 0
        %1450 = vmatprep.subr.bf16.mxu0 0
        %1451 = vmatpush1.bf16.msra.mxu0 0
        %1452 = vmatprep.subr.bf16.mxu0 0
        %1453 = vmatpush1.bf16.msra.mxu0 0
        %1454 = vmatprep.subr.bf16.mxu0 0
        %1455 = vmatpush1.bf16.msra.mxu0 0
        %1456 = vmatprep.subr.bf16.mxu0 0
        %1457 = vmatpush1.bf16.msra.mxu0 0
        %1458 = vmatprep.subr.bf16.mxu0 0
        %1459 = vmatpush1.bf16.msra.mxu0 0
        %1460 = vmatprep.subr.bf16.mxu0 0
        %1461 = vmatpush1.bf16.msra.mxu0 0
        %1462 = vmatprep.subr.bf16.mxu0 0
        %1463 = vmatpush1.bf16.msra.mxu0 0
        %1464 = vmatprep.subr.bf16.mxu0 0
        %1465 = vmatpush1.bf16.msra.mxu0 0
        %1466 = vmatprep.subr.bf16.mxu0 0
        %1467 = vmatpush1.bf16.msra.mxu0 0
        %1468 = vmatprep.subr.bf16.mxu0 0
        %1469 = vmatpush1.bf16.msra.mxu0 0
        %1470 = vmatprep.subr.bf16.mxu0 0
        %1471 = vmatpush1.bf16.msra.mxu0 0
        %1472 = vmatprep.mubr.bf16.mxu0 0
        %1473 = vmatmul.mubr.bf16.gmra.mrb[0].mxu0 %v1435
        %v1474 = vpop.f32.mrb[0].mxu0
        %v1475 = vadd.f32 0.0, %v1474
        %v1476 = vpop.f32.mrb[0].mxu0
        %v1477 = vpop.f32.mrb[0].mxu0
        %v1478 = vadd.f32 0.0, %v1477
        %v1479 = vpop.f32.mrb[0].mxu0
        %1480 = vmatprep.mubr.bf16.mxu0 0
        %1481 = vmatmul.mubr.bf16.gmra.mrb[0].mxu0 %v1438
        %v1482 = vpop.f32.mrb[0].mxu0
        %v1483 = vadd.f32 0.0, %v1482
        %v1484 = vpop.f32.mrb[0].mxu0
        %v1485 = vpop.f32.mrb[0].mxu0
        %v1486 = vadd.f32 0.0, %v1485
        %v1487 = vpop.f32.mrb[0].mxu0
        %1488 = vdwg.mxu0
        %s1489 = scalar_lea.vmem %s5, 224
        %v1490 = vld [vmem:[%s1489] sm:$0xff]
        %v1491 = vld [vmem:[%s1489 + $0x8] sm:$0xff]
        %v1492 = vld [vmem:[%s1489 + $0x10] sm:$0xff]
        %v1493 = vld [vmem:[%s1489 + $0x18] sm:$0xff]
        %v1494 = vpack.c.bf16 %v1478, %v1475
        %v1495 = vpack.c.bf16 %v1486, %v1483
        %v1496 = vpack.c.bf16 %v1491, %v1490
        %v1497 = vpack.c.bf16 %v1493, %v1492
        %1499 = vset.pattern.permute.xlu0 0
        %1500 = vperm.xlu0 %1499, %v1496
        %v1501 = vpop.permute.xlu0 %1500
        %1504 = vset.pattern.permute.xlu0 0
        %1505 = vperm.xlu0 %1504, %v1497
        %v1506 = vpop.permute.xlu0 %1505
        %v1508 = vadd.bf16 %v1494, %v1501
        %v1509 = vadd.bf16 %v1495, %v1506
        %v1510 = vmax.bf16 %v1508, 0
        %v1511 = vmax.bf16 %v1509, 0
        %s1512 = scalar_lea.vmem %s4, 128
        %v1513 = vld [vmem:[%s1512] sm:$0xf]
        %v1514 = vld [vmem:[%s1512 + $0x4] sm:$0xf]
        %v1515 = vld [vmem:[%s1512 + $0x8] sm:$0xf]
        %v1516 = vld [vmem:[%s1512 + $0xc] sm:$0xf]
        %v1521 = vunpack.c.l.b16 %v1513
        %v1522 = vunpack.c.l.b16 %v1514
        %v1523 = vunpack.c.l.b16 %v1515
        %v1524 = vunpack.c.l.b16 %v1516
        %v1525 = vpack.c.b16 %v1522, %v1521
        %v1526 = vpack.c.b16 %v1524, %v1523
        %v1528 = vsel %vm485, %v1525, 0
        %v1531 = vsel %vm485, %v1526, 0
        %1533 = vmatprep.subr.bf16.mxu0 0
        %1534 = vmatpush1.bf16.msra.mxu0 %v1510
        %1535 = vmatprep.subr.bf16.mxu0 0
        %1536 = vmatpush1.bf16.msra.mxu0 %v1511
        %1537 = vmatprep.subr.bf16.mxu0 0
        %1538 = vmatpush1.bf16.msra.mxu0 0
        %1539 = vmatprep.subr.bf16.mxu0 0
        %1540 = vmatpush1.bf16.msra.mxu0 0
        %1541 = vmatprep.subr.bf16.mxu0 0
        %1542 = vmatpush1.bf16.msra.mxu0 0
        %1543 = vmatprep.subr.bf16.mxu0 0
        %1544 = vmatpush1.bf16.msra.mxu0 0
        %1545 = vmatprep.subr.bf16.mxu0 0
        %1546 = vmatpush1.bf16.msra.mxu0 0
        %1547 = vmatprep.subr.bf16.mxu0 0
        %1548 = vmatpush1.bf16.msra.mxu0 0
        %1549 = vmatprep.subr.bf16.mxu0 0
        %1550 = vmatpush1.bf16.msra.mxu0 0
        %1551 = vmatprep.subr.bf16.mxu0 0
        %1552 = vmatpush1.bf16.msra.mxu0 0
        %1553 = vmatprep.subr.bf16.mxu0 0
        %1554 = vmatpush1.bf16.msra.mxu0 0
        %1555 = vmatprep.subr.bf16.mxu0 0
        %1556 = vmatpush1.bf16.msra.mxu0 0
        %1557 = vmatprep.subr.bf16.mxu0 0
        %1558 = vmatpush1.bf16.msra.mxu0 0
        %1559 = vmatprep.subr.bf16.mxu0 0
        %1560 = vmatpush1.bf16.msra.mxu0 0
        %1561 = vmatprep.subr.bf16.mxu0 0
        %1562 = vmatpush1.bf16.msra.mxu0 0
        %1563 = vmatprep.subr.bf16.mxu0 0
        %1564 = vmatpush1.bf16.msra.mxu0 0
        %1565 = vmatprep.mubr.bf16.mxu0 0
        %1566 = vmatmul.mubr.bf16.gmra.mrb[0].mxu0 %v1528
        %v1567 = vpop.f32.mrb[0].mxu0
        %v1568 = vadd.f32 0.0, %v1567
        %v1569 = vpop.f32.mrb[0].mxu0
        %v1570 = vpop.f32.mrb[0].mxu0
        %v1571 = vadd.f32 0.0, %v1570
        %v1572 = vpop.f32.mrb[0].mxu0
        %1573 = vmatprep.mubr.bf16.mxu0 0
        %1574 = vmatmul.mubr.bf16.gmra.mrb[0].mxu0 %v1531
        %v1575 = vpop.f32.mrb[0].mxu0
        %v1576 = vadd.f32 0.0, %v1575
        %v1577 = vpop.f32.mrb[0].mxu0
        %v1578 = vpop.f32.mrb[0].mxu0
        %v1579 = vadd.f32 0.0, %v1578
        %v1580 = vpop.f32.mrb[0].mxu0
        %1581 = vdwg.mxu0
        %s1582 = scalar_lea.vmem %s5, 256
        %v1583 = vld [vmem:[%s1582] sm:$0xff]
        %v1584 = vld [vmem:[%s1582 + $0x8] sm:$0xff]
        %v1585 = vld [vmem:[%s1582 + $0x10] sm:$0xff]
        %v1586 = vld [vmem:[%s1582 + $0x18] sm:$0xff]
        %v1587 = vpack.c.bf16 %v1571, %v1568
        %v1588 = vpack.c.bf16 %v1579, %v1576
        %v1589 = vpack.c.bf16 %v1584, %v1583
        %v1590 = vpack.c.bf16 %v1586, %v1585
        %1592 = vset.pattern.permute.xlu0 0
        %1593 = vperm.xlu0 %1592, %v1589
        %v1594 = vpop.permute.xlu0 %1593
        %1597 = vset.pattern.permute.xlu0 0
        %1598 = vperm.xlu0 %1597, %v1590
        %v1599 = vpop.permute.xlu0 %1598
        %v1601 = vadd.bf16 %v1587, %v1594
        %v1602 = vadd.bf16 %v1588, %v1599
        %v1603 = vmax.bf16 %v1601, 0
        %v1604 = vmax.bf16 %v1602, 0
        %s1605 = scalar_lea.vmem %s6, 8
        %v1606 = vld [vmem:[%s1605] sm:$0xf]
        %s1607 = scalar_lea.vmem %s7, 16
        %v1608 = vld [vmem:[%s1607] sm:$0xff]
        %1610 = vset.pattern.permute.xlu0 0
        %1611 = vperm.xlu0 %1610, %v1608
        %v1612 = vpop.permute.xlu0 %1611
        %v1615 = vsel %vm485, %v1606, 0
        %1617 = vmatprep.subr.bf16.mxu0 0
        %1618 = vmatpush1.bf16.msra.mxu0 %v1603
        %1619 = vmatprep.subr.bf16.mxu0 0
        %1620 = vmatpush1.bf16.msra.mxu0 %v1604
        %1621 = vmatprep.subr.bf16.mxu0 0
        %1622 = vmatpush1.bf16.msra.mxu0 0
        %1623 = vmatprep.subr.bf16.mxu0 0
        %1624 = vmatpush1.bf16.msra.mxu0 0
        %1625 = vmatprep.subr.bf16.mxu0 0
        %1626 = vmatpush1.bf16.msra.mxu0 0
        %1627 = vmatprep.subr.bf16.mxu0 0
        %1628 = vmatpush1.bf16.msra.mxu0 0
        %1629 = vmatprep.subr.bf16.mxu0 0
        %1630 = vmatpush1.bf16.msra.mxu0 0
        %1631 = vmatprep.subr.bf16.mxu0 0
        %1632 = vmatpush1.bf16.msra.mxu0 0
        %1633 = vmatprep.subr.bf16.mxu0 0
        %1634 = vmatpush1.bf16.msra.mxu0 0
        %1635 = vmatprep.subr.bf16.mxu0 0
        %1636 = vmatpush1.bf16.msra.mxu0 0
        %1637 = vmatprep.subr.bf16.mxu0 0
        %1638 = vmatpush1.bf16.msra.mxu0 0
        %1639 = vmatprep.subr.bf16.mxu0 0
        %1640 = vmatpush1.bf16.msra.mxu0 0
        %1641 = vmatprep.subr.bf16.mxu0 0
        %1642 = vmatpush1.bf16.msra.mxu0 0
        %1643 = vmatprep.subr.bf16.mxu0 0
        %1644 = vmatpush1.bf16.msra.mxu0 0
        %1645 = vmatprep.subr.bf16.mxu0 0
        %1646 = vmatpush1.bf16.msra.mxu0 0
        %1647 = vmatprep.subr.bf16.mxu0 0
        %1648 = vmatpush1.bf16.msra.mxu0 0
        %1649 = vmatprep.mubr.bf16.mxu0 0
        %1650 = vmatmul.mubr.bf16.gmra.mrb[0].mxu0 %v1615
        %v1651 = vpop.f32.mrb[0].mxu0
        %v1652 = vadd.f32 %v1612, %v1651
        %v1653 = vpop.f32.mrb[0].mxu0
        %v1654 = vpop.f32.mrb[0].mxu0
        %v1655 = vpop.f32.mrb[0].mxu0
        %1656 = vdwg.mxu0
        %v1657 = vadd.f32 %v799, %v1652
        %s1658 = scalar_lea.vmem %s2, 48
        %v1659 = vld [vmem:[%s1658] sm:$0xf]
        %v1660 = vld [vmem:[%s1658 + $0x4] sm:$0xf]
        %v1661 = vld [vmem:[%s1658 + $0x8] sm:$0xf]
        %v1662 = vld [vmem:[%s1658 + $0xc] sm:$0xf]
        %v1663 = vpack.c.bf16 %v1657, %v1657
        %v1668 = vunpack.c.l.b16 %v1659
        %v1669 = vunpack.c.l.b16 %v1660
        %v1670 = vunpack.c.l.b16 %v1661
        %v1671 = vunpack.c.l.b16 %v1662
        %v1672 = vpack.c.b16 %v1669, %v1668
        %v1673 = vpack.c.b16 %v1671, %v1670
        %v1675 = vsel %vm389, %v1672, 0
        %v1678 = vsel %vm389, %v1673, 0
        %v1681 = vsel %vm396, %v1663, 0
        %1683 = vmatprep.subr.bf16.mxu0 0
        %1684 = vmatpush1.bf16.msra.mxu0 %v1681
        %1685 = vmatprep.subr.bf16.mxu0 0
        %1686 = vmatpush1.bf16.msra.mxu0 0
        %1687 = vmatprep.subr.bf16.mxu0 0
        %1688 = vmatpush1.bf16.msra.mxu0 0
        %1689 = vmatprep.subr.bf16.mxu0 0
        %1690 = vmatpush1.bf16.msra.mxu0 0
        %1691 = vmatprep.subr.bf16.mxu0 0
        %1692 = vmatpush1.bf16.msra.mxu0 0
        %1693 = vmatprep.subr.bf16.mxu0 0
        %1694 = vmatpush1.bf16.msra.mxu0 0
        %1695 = vmatprep.subr.bf16.mxu0 0
        %1696 = vmatpush1.bf16.msra.mxu0 0
        %1697 = vmatprep.subr.bf16.mxu0 0
        %1698 = vmatpush1.bf16.msra.mxu0 0
        %1699 = vmatprep.subr.bf16.mxu0 0
        %1700 = vmatpush1.bf16.msra.mxu0 0
        %1701 = vmatprep.subr.bf16.mxu0 0
        %1702 = vmatpush1.bf16.msra.mxu0 0
        %1703 = vmatprep.subr.bf16.mxu0 0
        %1704 = vmatpush1.bf16.msra.mxu0 0
        %1705 = vmatprep.subr.bf16.mxu0 0
        %1706 = vmatpush1.bf16.msra.mxu0 0
        %1707 = vmatprep.subr.bf16.mxu0 0
        %1708 = vmatpush1.bf16.msra.mxu0 0
        %1709 = vmatprep.subr.bf16.mxu0 0
        %1710 = vmatpush1.bf16.msra.mxu0 0
        %1711 = vmatprep.subr.bf16.mxu0 0
        %1712 = vmatpush1.bf16.msra.mxu0 0
        %1713 = vmatprep.subr.bf16.mxu0 0
        %1714 = vmatpush1.bf16.msra.mxu0 0
        %1715 = vmatprep.mubr.bf16.mxu0 0
        %1716 = vmatmul.mubr.bf16.gmra.mrb[0].mxu0 %v1675
        %v1717 = vpop.f32.mrb[0].mxu0
        %v1718 = vadd.f32 0.0, %v1717
        %v1719 = vpop.f32.mrb[0].mxu0
        %v1720 = vpop.f32.mrb[0].mxu0
        %v1721 = vadd.f32 0.0, %v1720
        %v1722 = vpop.f32.mrb[0].mxu0
        %1723 = vmatprep.mubr.bf16.mxu0 0
        %1724 = vmatmul.mubr.bf16.gmra.mrb[0].mxu0 %v1678
        %v1725 = vpop.f32.mrb[0].mxu0
        %v1726 = vadd.f32 0.0, %v1725
        %v1727 = vpop.f32.mrb[0].mxu0
        %v1728 = vpop.f32.mrb[0].mxu0
        %v1729 = vadd.f32 0.0, %v1728
        %v1730 = vpop.f32.mrb[0].mxu0
        %1731 = vdwg.mxu0
        %s1732 = scalar_lea.vmem %s3, 96
        %v1733 = vld [vmem:[%s1732] sm:$0xff]
        %v1734 = vld [vmem:[%s1732 + $0x8] sm:$0xff]
        %v1735 = vld [vmem:[%s1732 + $0x10] sm:$0xff]
        %v1736 = vld [vmem:[%s1732 + $0x18] sm:$0xff]
        %v1737 = vpack.c.bf16 %v1721, %v1718
        %v1738 = vpack.c.bf16 %v1729, %v1726
        %v1739 = vpack.c.bf16 %v1734, %v1733
        %v1740 = vpack.c.bf16 %v1736, %v1735
        %1742 = vset.pattern.permute.xlu0 0
        %1743 = vperm.xlu0 %1742, %v1739
        %v1744 = vpop.permute.xlu0 %1743
        %1747 = vset.pattern.permute.xlu0 0
        %1748 = vperm.xlu0 %1747, %v1740
        %v1749 = vpop.permute.xlu0 %1748
        %v1751 = vadd.bf16 %v1737, %v1744
        %v1752 = vadd.bf16 %v1738, %v1749
        %v1753 = vmax.bf16 %v1751, 0
        %v1754 = vmax.bf16 %v1752, 0
        %s1755 = scalar_lea.vmem %s4, 144
        %v1756 = vld [vmem:[%s1755] sm:$0xf]
        %v1757 = vld [vmem:[%s1755 + $0x4] sm:$0xf]
        %v1758 = vld [vmem:[%s1755 + $0x8] sm:$0xf]
        %v1759 = vld [vmem:[%s1755 + $0xc] sm:$0xf]
        %v1764 = vunpack.c.l.b16 %v1756
        %v1765 = vunpack.c.l.b16 %v1757
        %v1766 = vunpack.c.l.b16 %v1758
        %v1767 = vunpack.c.l.b16 %v1759
        %v1768 = vpack.c.b16 %v1765, %v1764
        %v1769 = vpack.c.b16 %v1767, %v1766
        %v1771 = vsel %vm485, %v1768, 0
        %v1774 = vsel %vm485, %v1769, 0
        %1776 = vmatprep.subr.bf16.mxu0 0
        %1777 = vmatpush1.bf16.msra.mxu0 %v1753
        %1778 = vmatprep.subr.bf16.mxu0 0
        %1779 = vmatpush1.bf16.msra.mxu0 %v1754
        %1780 = vmatprep.subr.bf16.mxu0 0
        %1781 = vmatpush1.bf16.msra.mxu0 0
        %1782 = vmatprep.subr.bf16.mxu0 0
        %1783 = vmatpush1.bf16.msra.mxu0 0
        %1784 = vmatprep.subr.bf16.mxu0 0
        %1785 = vmatpush1.bf16.msra.mxu0 0
        %1786 = vmatprep.subr.bf16.mxu0 0
        %1787 = vmatpush1.bf16.msra.mxu0 0
        %1788 = vmatprep.subr.bf16.mxu0 0
        %1789 = vmatpush1.bf16.msra.mxu0 0
        %1790 = vmatprep.subr.bf16.mxu0 0
        %1791 = vmatpush1.bf16.msra.mxu0 0
        %1792 = vmatprep.subr.bf16.mxu0 0
        %1793 = vmatpush1.bf16.msra.mxu0 0
        %1794 = vmatprep.subr.bf16.mxu0 0
        %1795 = vmatpush1.bf16.msra.mxu0 0
        %1796 = vmatprep.subr.bf16.mxu0 0
        %1797 = vmatpush1.bf16.msra.mxu0 0
        %1798 = vmatprep.subr.bf16.mxu0 0
        %1799 = vmatpush1.bf16.msra.mxu0 0
        %1800 = vmatprep.subr.bf16.mxu0 0
        %1801 = vmatpush1.bf16.msra.mxu0 0
        %1802 = vmatprep.subr.bf16.mxu0 0
        %1803 = vmatpush1.bf16.msra.mxu0 0
        %1804 = vmatprep.subr.bf16.mxu0 0
        %1805 = vmatpush1.bf16.msra.mxu0 0
        %1806 = vmatprep.subr.bf16.mxu0 0
        %1807 = vmatpush1.bf16.msra.mxu0 0
        %1808 = vmatprep.mubr.bf16.mxu0 0
        %1809 = vmatmul.mubr.bf16.gmra.mrb[0].mxu0 %v1771
        %v1810 = vpop.f32.mrb[0].mxu0
        %v1811 = vadd.f32 0.0, %v1810
        %v1812 = vpop.f32.mrb[0].mxu0
        %v1813 = vpop.f32.mrb[0].mxu0
        %v1814 = vadd.f32 0.0, %v1813
        %v1815 = vpop.f32.mrb[0].mxu0
        %1816 = vmatprep.mubr.bf16.mxu0 0
        %1817 = vmatmul.mubr.bf16.gmra.mrb[0].mxu0 %v1774
        %v1818 = vpop.f32.mrb[0].mxu0
        %v1819 = vadd.f32 0.0, %v1818
        %v1820 = vpop.f32.mrb[0].mxu0
        %v1821 = vpop.f32.mrb[0].mxu0
        %v1822 = vadd.f32 0.0, %v1821
        %v1823 = vpop.f32.mrb[0].mxu0
        %1824 = vdwg.mxu0
        %s1825 = scalar_lea.vmem %s5, 288
        %v1826 = vld [vmem:[%s1825] sm:$0xff]
        %v1827 = vld [vmem:[%s1825 + $0x8] sm:$0xff]
        %v1828 = vld [vmem:[%s1825 + $0x10] sm:$0xff]
        %v1829 = vld [vmem:[%s1825 + $0x18] sm:$0xff]
        %v1830 = vpack.c.bf16 %v1814, %v1811
        %v1831 = vpack.c.bf16 %v1822, %v1819
        %v1832 = vpack.c.bf16 %v1827, %v1826
        %v1833 = vpack.c.bf16 %v1829, %v1828
        %1835 = vset.pattern.permute.xlu0 0
        %1836 = vperm.xlu0 %1835, %v1832
        %v1837 = vpop.permute.xlu0 %1836
        %1840 = vset.pattern.permute.xlu0 0
        %1841 = vperm.xlu0 %1840, %v1833
        %v1842 = vpop.permute.xlu0 %1841
        %v1844 = vadd.bf16 %v1830, %v1837
        %v1845 = vadd.bf16 %v1831, %v1842
        %v1846 = vmax.bf16 %v1844, 0
        %v1847 = vmax.bf16 %v1845, 0
        %s1848 = scalar_lea.vmem %s4, 160
        %v1849 = vld [vmem:[%s1848] sm:$0xf]
        %v1850 = vld [vmem:[%s1848 + $0x4] sm:$0xf]
        %v1851 = vld [vmem:[%s1848 + $0x8] sm:$0xf]
        %v1852 = vld [vmem:[%s1848 + $0xc] sm:$0xf]
        %v1857 = vunpack.c.l.b16 %v1849
        %v1858 = vunpack.c.l.b16 %v1850
        %v1859 = vunpack.c.l.b16 %v1851
        %v1860 = vunpack.c.l.b16 %v1852
        %v1861 = vpack.c.b16 %v1858, %v1857
        %v1862 = vpack.c.b16 %v1860, %v1859
        %v1864 = vsel %vm485, %v1861, 0
        %v1867 = vsel %vm485, %v1862, 0
        %1869 = vmatprep.subr.bf16.mxu0 0
        %1870 = vmatpush1.bf16.msra.mxu0 %v1846
        %1871 = vmatprep.subr.bf16.mxu0 0
        %1872 = vmatpush1.bf16.msra.mxu0 %v1847
        %1873 = vmatprep.subr.bf16.mxu0 0
        %1874 = vmatpush1.bf16.msra.mxu0 0
        %1875 = vmatprep.subr.bf16.mxu0 0
        %1876 = vmatpush1.bf16.msra.mxu0 0
        %1877 = vmatprep.subr.bf16.mxu0 0
        %1878 = vmatpush1.bf16.msra.mxu0 0
        %1879 = vmatprep.subr.bf16.mxu0 0
        %1880 = vmatpush1.bf16.msra.mxu0 0
        %1881 = vmatprep.subr.bf16.mxu0 0
        %1882 = vmatpush1.bf16.msra.mxu0 0
        %1883 = vmatprep.subr.bf16.mxu0 0
        %1884 = vmatpush1.bf16.msra.mxu0 0
        %1885 = vmatprep.subr.bf16.mxu0 0
        %1886 = vmatpush1.bf16.msra.mxu0 0
        %1887 = vmatprep.subr.bf16.mxu0 0
        %1888 = vmatpush1.bf16.msra.mxu0 0
        %1889 = vmatprep.subr.bf16.mxu0 0
        %1890 = vmatpush1.bf16.msra.mxu0 0
        %1891 = vmatprep.subr.bf16.mxu0 0
        %1892 = vmatpush1.bf16.msra.mxu0 0
        %1893 = vmatprep.subr.bf16.mxu0 0
        %1894 = vmatpush1.bf16.msra.mxu0 0
        %1895 = vmatprep.subr.bf16.mxu0 0
        %1896 = vmatpush1.bf16.msra.mxu0 0
        %1897 = vmatprep.subr.bf16.mxu0 0
        %1898 = vmatpush1.bf16.msra.mxu0 0
        %1899 = vmatprep.subr.bf16.mxu0 0
        %1900 = vmatpush1.bf16.msra.mxu0 0
        %1901 = vmatprep.mubr.bf16.mxu0 0
        %1902 = vmatmul.mubr.bf16.gmra.mrb[0].mxu0 %v1864
        %v1903 = vpop.f32.mrb[0].mxu0
        %v1904 = vadd.f32 0.0, %v1903
        %v1905 = vpop.f32.mrb[0].mxu0
        %v1906 = vpop.f32.mrb[0].mxu0
        %v1907 = vadd.f32 0.0, %v1906
        %v1908 = vpop.f32.mrb[0].mxu0
        %1909 = vmatprep.mubr.bf16.mxu0 0
        %1910 = vmatmul.mubr.bf16.gmra.mrb[0].mxu0 %v1867
        %v1911 = vpop.f32.mrb[0].mxu0
        %v1912 = vadd.f32 0.0, %v1911
        %v1913 = vpop.f32.mrb[0].mxu0
        %v1914 = vpop.f32.mrb[0].mxu0
        %v1915 = vadd.f32 0.0, %v1914
        %v1916 = vpop.f32.mrb[0].mxu0
        %1917 = vdwg.mxu0
        %s1918 = scalar_lea.vmem %s5, 320
        %v1919 = vld [vmem:[%s1918] sm:$0xff]
        %v1920 = vld [vmem:[%s1918 + $0x8] sm:$0xff]
        %v1921 = vld [vmem:[%s1918 + $0x10] sm:$0xff]
        %v1922 = vld [vmem:[%s1918 + $0x18] sm:$0xff]
        %v1923 = vpack.c.bf16 %v1907, %v1904
        %v1924 = vpack.c.bf16 %v1915, %v1912
        %v1925 = vpack.c.bf16 %v1920, %v1919
        %v1926 = vpack.c.bf16 %v1922, %v1921
        %1928 = vset.pattern.permute.xlu0 0
        %1929 = vperm.xlu0 %1928, %v1925
        %v1930 = vpop.permute.xlu0 %1929
        %1933 = vset.pattern.permute.xlu0 0
        %1934 = vperm.xlu0 %1933, %v1926
        %v1935 = vpop.permute.xlu0 %1934
        %v1937 = vadd.bf16 %v1923, %v1930
        %v1938 = vadd.bf16 %v1924, %v1935
        %v1939 = vmax.bf16 %v1937, 0
        %v1940 = vmax.bf16 %v1938, 0
        %s1941 = scalar_lea.vmem %s4, 176
        %v1942 = vld [vmem:[%s1941] sm:$0xf]
        %v1943 = vld [vmem:[%s1941 + $0x4] sm:$0xf]
        %v1944 = vld [vmem:[%s1941 + $0x8] sm:$0xf]
        %v1945 = vld [vmem:[%s1941 + $0xc] sm:$0xf]
        %v1950 = vunpack.c.l.b16 %v1942
        %v1951 = vunpack.c.l.b16 %v1943
        %v1952 = vunpack.c.l.b16 %v1944
        %v1953 = vunpack.c.l.b16 %v1945
        %v1954 = vpack.c.b16 %v1951, %v1950
        %v1955 = vpack.c.b16 %v1953, %v1952
        %v1957 = vsel %vm485, %v1954, 0
        %v1960 = vsel %vm485, %v1955, 0
        %1962 = vmatprep.subr.bf16.mxu0 0
        %1963 = vmatpush1.bf16.msra.mxu0 %v1939
        %1964 = vmatprep.subr.bf16.mxu0 0
        %1965 = vmatpush1.bf16.msra.mxu0 %v1940
        %1966 = vmatprep.subr.bf16.mxu0 0
        %1967 = vmatpush1.bf16.msra.mxu0 0
        %1968 = vmatprep.subr.bf16.mxu0 0
        %1969 = vmatpush1.bf16.msra.mxu0 0
        %1970 = vmatprep.subr.bf16.mxu0 0
        %1971 = vmatpush1.bf16.msra.mxu0 0
        %1972 = vmatprep.subr.bf16.mxu0 0
        %1973 = vmatpush1.bf16.msra.mxu0 0
        %1974 = vmatprep.subr.bf16.mxu0 0
        %1975 = vmatpush1.bf16.msra.mxu0 0
        %1976 = vmatprep.subr.bf16.mxu0 0
        %1977 = vmatpush1.bf16.msra.mxu0 0
        %1978 = vmatprep.subr.bf16.mxu0 0
        %1979 = vmatpush1.bf16.msra.mxu0 0
        %1980 = vmatprep.subr.bf16.mxu0 0
        %1981 = vmatpush1.bf16.msra.mxu0 0
        %1982 = vmatprep.subr.bf16.mxu0 0
        %1983 = vmatpush1.bf16.msra.mxu0 0
        %1984 = vmatprep.subr.bf16.mxu0 0
        %1985 = vmatpush1.bf16.msra.mxu0 0
        %1986 = vmatprep.subr.bf16.mxu0 0
        %1987 = vmatpush1.bf16.msra.mxu0 0
        %1988 = vmatprep.subr.bf16.mxu0 0
        %1989 = vmatpush1.bf16.msra.mxu0 0
        %1990 = vmatprep.subr.bf16.mxu0 0
        %1991 = vmatpush1.bf16.msra.mxu0 0
        %1992 = vmatprep.subr.bf16.mxu0 0
        %1993 = vmatpush1.bf16.msra.mxu0 0
        %1994 = vmatprep.mubr.bf16.mxu0 0
        %1995 = vmatmul.mubr.bf16.gmra.mrb[0].mxu0 %v1957
        %v1996 = vpop.f32.mrb[0].mxu0
        %v1997 = vadd.f32 0.0, %v1996
        %v1998 = vpop.f32.mrb[0].mxu0
        %v1999 = vpop.f32.mrb[0].mxu0
        %v2000 = vadd.f32 0.0, %v1999
        %v2001 = vpop.f32.mrb[0].mxu0
        %2002 = vmatprep.mubr.bf16.mxu0 0
        %2003 = vmatmul.mubr.bf16.gmra.mrb[0].mxu0 %v1960
        %v2004 = vpop.f32.mrb[0].mxu0
        %v2005 = vadd.f32 0.0, %v2004
        %v2006 = vpop.f32.mrb[0].mxu0
        %v2007 = vpop.f32.mrb[0].mxu0
        %v2008 = vadd.f32 0.0, %v2007
        %v2009 = vpop.f32.mrb[0].mxu0
        %2010 = vdwg.mxu0
        %s2011 = scalar_lea.vmem %s5, 352
        %v2012 = vld [vmem:[%s2011] sm:$0xff]
        %v2013 = vld [vmem:[%s2011 + $0x8] sm:$0xff]
        %v2014 = vld [vmem:[%s2011 + $0x10] sm:$0xff]
        %v2015 = vld [vmem:[%s2011 + $0x18] sm:$0xff]
        %v2016 = vpack.c.bf16 %v2000, %v1997
        %v2017 = vpack.c.bf16 %v2008, %v2005
        %v2018 = vpack.c.bf16 %v2013, %v2012
        %v2019 = vpack.c.bf16 %v2015, %v2014
        %2021 = vset.pattern.permute.xlu0 0
        %2022 = vperm.xlu0 %2021, %v2018
        %v2023 = vpop.permute.xlu0 %2022
        %2026 = vset.pattern.permute.xlu0 0
        %2027 = vperm.xlu0 %2026, %v2019
        %v2028 = vpop.permute.xlu0 %2027
        %v2030 = vadd.bf16 %v2016, %v2023
        %v2031 = vadd.bf16 %v2017, %v2028
        %v2032 = vmax.bf16 %v2030, 0
        %v2033 = vmax.bf16 %v2031, 0
        %s2034 = scalar_lea.vmem %s6, 12
        %v2035 = vld [vmem:[%s2034] sm:$0xf]
        %s2036 = scalar_lea.vmem %s7, 24
        %v2037 = vld [vmem:[%s2036] sm:$0xff]
        %2039 = vset.pattern.permute.xlu0 0
        %2040 = vperm.xlu0 %2039, %v2037
        %v2041 = vpop.permute.xlu0 %2040
        %v2044 = vsel %vm485, %v2035, 0
        %2046 = vmatprep.subr.bf16.mxu0 0
        %2047 = vmatpush1.bf16.msra.mxu0 %v2032
        %2048 = vmatprep.subr.bf16.mxu0 0
        %2049 = vmatpush1.bf16.msra.mxu0 %v2033
        %2050 = vmatprep.subr.bf16.mxu0 0
        %2051 = vmatpush1.bf16.msra.mxu0 0
        %2052 = vmatprep.subr.bf16.mxu0 0
        %2053 = vmatpush1.bf16.msra.mxu0 0
        %2054 = vmatprep.subr.bf16.mxu0 0
        %2055 = vmatpush1.bf16.msra.mxu0 0
        %2056 = vmatprep.subr.bf16.mxu0 0
        %2057 = vmatpush1.bf16.msra.mxu0 0
        %2058 = vmatprep.subr.bf16.mxu0 0
        %2059 = vmatpush1.bf16.msra.mxu0 0
        %2060 = vmatprep.subr.bf16.mxu0 0
        %2061 = vmatpush1.bf16.msra.mxu0 0
        %2062 = vmatprep.subr.bf16.mxu0 0
        %2063 = vmatpush1.bf16.msra.mxu0 0
        %2064 = vmatprep.subr.bf16.mxu0 0
        %2065 = vmatpush1.bf16.msra.mxu0 0
        %2066 = vmatprep.subr.bf16.mxu0 0
        %2067 = vmatpush1.bf16.msra.mxu0 0
        %2068 = vmatprep.subr.bf16.mxu0 0
        %2069 = vmatpush1.bf16.msra.mxu0 0
        %2070 = vmatprep.subr.bf16.mxu0 0
        %2071 = vmatpush1.bf16.msra.mxu0 0
        %2072 = vmatprep.subr.bf16.mxu0 0
        %2073 = vmatpush1.bf16.msra.mxu0 0
        %2074 = vmatprep.subr.bf16.mxu0 0
        %2075 = vmatpush1.bf16.msra.mxu0 0
        %2076 = vmatprep.subr.bf16.mxu0 0
        %2077 = vmatpush1.bf16.msra.mxu0 0
        %2078 = vmatprep.mubr.bf16.mxu0 0
        %2079 = vmatmul.mubr.bf16.gmra.mrb[0].mxu0 %v2044
        %v2080 = vpop.f32.mrb[0].mxu0
        %v2081 = vadd.f32 %v2041, %v2080
        %v2082 = vpop.f32.mrb[0].mxu0
        %v2083 = vpop.f32.mrb[0].mxu0
        %v2084 = vpop.f32.mrb[0].mxu0
        %2085 = vdwg.mxu0
        %v2086 = vadd.f32 %v1228, %v2081
        %v2087 = vld [vmem:[%s8] sm:$0xff]
        %2089 = vset.pattern.permute.xlu0 0
        %2090 = vperm.xlu0 %2089, %v2087
        %v2091 = vpop.permute.xlu0 %2090
        %v2093 = vmul.f32 %v1657, %v2091
        %v2094 = vld [vmem:[%s9] sm:$0xff]
        %2096 = vset.pattern.permute.xlu0 0
        %2097 = vperm.xlu0 %2096, %v2094
        %v2098 = vpop.permute.xlu0 %2097
        %v2100 = vmul.f32 %v2086, %v2098
        %v2101 = vand.u32 2147483647, %v2093
        %v2102 = vand.u32 2147483647, %v2100
        %v2103 = vsub.f32 0.0, %v2101
        %v2104 = vmul.f32 %v2103, 1.442695
        %v2105 = vpow.pop %v2104
        %v2106 = vadd.f32 %v2105, 1.0
        %v2107 = vlog2.pop %v2106
        %v2108 = vmul.f32 %v2107, 0.6931472
        %v2109 = vmul.f32 -0.5, %v2105
        %v2110 = vadd.f32 %v2109, 1.0
        %v2111 = vmul.f32 %v2110, %v2105
        %v2112 = vand.u32 2147483647, %v2105
        %vm2113 = vcmp.lt.f32.partialorder %v2112, 0.0004427343
        %v2114 = vsel %vm2113, %v2111, %v2108
        %v2115 = vmul.f32 %v2114, 2.0
        %v2116 = vadd.f32 %v2101, %v2115
        %v2117 = vsub.f32 0.0, %v2116
        %v2118 = vsub.f32 0.0, %v2102
        %v2119 = vmul.f32 %v2118, 1.442695
        %v2120 = vpow.pop %v2119
        %v2121 = vadd.f32 %v2120, 1.0
        %v2122 = vlog2.pop %v2121
        %v2123 = vmul.f32 %v2122, 0.6931472
        %v2124 = vmul.f32 -0.5, %v2120
        %v2125 = vadd.f32 %v2124, 1.0
        %v2126 = vmul.f32 %v2125, %v2120
        %v2127 = vand.u32 2147483647, %v2120
        %vm2128 = vcmp.lt.f32.partialorder %v2127, 0.0004427343
        %v2129 = vsel %vm2128, %v2126, %v2123
        %v2130 = vmul.f32 %v2129, 2.0
        %v2131 = vadd.f32 %v2102, %v2130
        %v2132 = vsub.f32 %v2117, %v2131
        %v2133 = vrot.slane %v2132, 4
        %v2134 = vadd.f32 %v2132, %v2133
        %v2135 = vrot.slane %v2134, 2
        %v2136 = vadd.f32 %v2134, %v2135
        %v2137 = vrot.slane %v2136, 1
        %v2138 = vadd.f32 %v2136, %v2137
        %2139 = vst [vmem:[%s362] sm:$0x1] %v2138
        %s2140 = sand.u32 %s252, 1
        %s2141 = scalar_lea.sflag [#allocation3], %s2140
        %s2142 = sand.u32 %s252, 1
        %s2143 = scalar_lea.vmem [#allocation2], %s2142
        // Predicated region
        $region61: #{tpu_custom_call.1} parent=59 // pred_check
          %p2144 = pneg %p262
        $region62: #{tpu_custom_call.1} parent=59 // pred_check_branch
          %2146 = sbr.rel (%p2144) target = $region64
        $region63: #{tpu_custom_call.1} parent=59 // pred_region
          %s2148 = ssub.s32 16, 16
          %2149 = vsyncadd %s2141, %s2148
          %s2150 = smul.addr %s24, 16
          %s2151 = scalar_lea.hbm %s10, %s2150
          %s2153 = sshll.u32 %s2143, 4
          %s2154 = int_to_ptr.vmem [resolvable:$true] %s2153
          %2156 = dma.vmem_to_hbm [thread:$0]  %s2154, 16, %s2151, %s2141
        $region64: #{tpu_custom_call.1} parent=59 // pred_fallthru
          _
      $region60: #{tpu_custom_call.1} parent=5 // pred_fallthru
        _
      %p2157 = scmp.le.s32.totalorder 2, %s19
      // Predicated region
      $region65: #{tpu_custom_call.1} parent=5 // pred_check
        %p2158 = pneg %p2157
      $region66: #{tpu_custom_call.1} parent=5 // pred_check_branch
        %2160 = sbr.rel (%p2158) target = $region68
      $region67: #{tpu_custom_call.1} parent=5 // pred_region
        %s2161 = ssub.s32 %s19, 2
        // Predicated region
        $region69: #{tpu_custom_call.1} parent=67 // pred_check
          %p2162 = pneg %p268
        $region70: #{tpu_custom_call.1} parent=67 // pred_check_branch
          %2164 = sbr.rel (%p2162) target = $region72
        $region71: #{tpu_custom_call.1} parent=67 // pred_region
          %s2165 = sand.u32 %s253, 1
          %s2166 = scalar_lea.sflag [#allocation3], %s2165
          %s2167 = sand.u32 %s253, 1
          %s2168 = scalar_lea.vmem [#allocation2], %s2167
          %2169 = dma.done %s2166, 16
        $region72: #{tpu_custom_call.1} parent=67 // pred_fallthru
          _
      $region68: #{tpu_custom_call.1} parent=5 // pred_fallthru
        _
    $region6: #{tpu_custom_call.1} parent=1 // loop_footer
      %s23 = sadd.s32 1, %s19
    $region7: #{tpu_custom_call.1} parent=1 // loop_footer_branch
      %18 = sbr.rel target = $region3
    $region8: #{tpu_custom_call.1} parent=1 // loop_exit
      _
    %2170 = vsyncpa [#allocation3], 1
    %s2171 = scalar_lea.sflag [#allocation3], 1
    %2172 = vsyncpa %s2171, 1

</llo_original>
